<compile_context>
chip_gen: v7x
topology: tpu7x:2x2x1
jax: 0.10.0
libtpu: 0.0.40
codegen_flags: <defaults>
</compile_context>

<pallas_src>
import jax
import jax.numpy as jnp
from jax.experimental import pallas as pl
from jax.experimental.pallas import tpu as pltpu


def _double_conv_kernel(x_ref, m1_ref, m2_ref, p_ref, pt_ref, gb_ref,
                        out_ref, mid_ref):
    # x_ref:   (1, H+2, W*Cin)       H-prepadded input, channels minor in lanes
    # m1_ref:  (3, W*Cin,  W*Cout)   banded conv1 weights, one band per dy
    # m2_ref:  (3, W*Cout, W*Cout)   banded conv2 weights
    # p_ref:   (W*Cout, Cout)        channel-sum matrix   (lanes -> channel)
    # pt_ref:  (Cout, W*Cout)        channel-broadcast matrix (channel -> lanes)
    # gb_ref:  (4, Cout)             rows: gamma1, beta1, gamma2, beta2
    # out_ref: (1, H, W*Cout)        lane-dense output slab
    # mid_ref: VMEM (H+2, W*Cout)    vertically padded intermediate activation
    H = out_ref.shape[1]
    wco = out_ref.shape[2]
    cout = p_ref.shape[1]
    inv_hw = 1.0 / float(H * (wco // cout))
    eps = 1e-5

    # Border rows of the intermediate scratch must be zero for block 2's
    # vertical padding.  Re-written every step (two tiny stores, not on the
    # critical path: the first matmuls read only x_ref).  NOT guarded by
    # program_id==0: with dimension_semantics=("parallel",) a second
    # TensorCore (v7x) never runs step 0 and scratch is per-core.
    zm = jnp.zeros((1, wco), jnp.float32)
    mid_ref[0:1, :] = zm
    mid_ref[H + 1:H + 2, :] = zm

    def conv3x3(get_rows, m_ref):
        # Horizontal zero padding is folded into the band matrices; vertical
        # padding is the two zero border rows of the source.
        acc = jnp.dot(get_rows(0), m_ref[0],
                      preferred_element_type=jnp.float32)
        acc = acc + jnp.dot(get_rows(1), m_ref[1],
                            preferred_element_type=jnp.float32)
        acc = acc + jnp.dot(get_rows(2), m_ref[2],
                            preferred_element_type=jnp.float32)
        return acc

    def inorm_lrelu(acc, gamma, beta):
        # InstanceNorm2d(affine) + LeakyReLU(0.01), E[x^2]-mean^2 form.
        # Conv bias omitted upstream (cancelled exactly by the mean
        # subtraction); gamma folded into the rsqrt scale.
        s = jnp.sum(acc, axis=0, keepdims=True)                     # (1, W*Co)
        ss = jnp.sum(acc * acc, axis=0, keepdims=True)              # (1, W*Co)
        sums_c = jnp.dot(jnp.concatenate([s, ss], axis=0), p_ref[...],
                         preferred_element_type=jnp.float32) * inv_hw  # (2, Co)
        mean_c = sums_c[0:1, :]
        var_c = sums_c[1:2, :] - mean_c * mean_c
        scale_c = gamma * jax.lax.rsqrt(var_c + eps)                 # (1, Co)
        bias_c = beta - mean_c * scale_c                             # (1, Co)
        sb = jnp.dot(jnp.concatenate([scale_c, bias_c], axis=0), pt_ref[...],
                     preferred_element_type=jnp.float32)             # (2, W*Co)
        y = acc * sb[0:1, :] + sb[1:2, :]
        return jnp.where(y >= 0, y, 0.01 * y)

    # ---- block 1: conv straight from the pre-padded input block ----
    acc1 = conv3x3(lambda dy: x_ref[0, dy:dy + H, :], m1_ref)
    y1 = inorm_lrelu(acc1, gb_ref[0:1, :], gb_ref[1:2, :])

    # ---- block 2: intermediate never leaves VMEM ----
    mid_ref[1:H + 1, :] = y1
    acc2 = conv3x3(lambda dy: mid_ref[dy:dy + H, :], m2_ref)
    y2 = inorm_lrelu(acc2, gb_ref[2:3, :], gb_ref[3:4, :])

    out_ref[0] = y2.astype(out_ref.dtype)


def _band_weights(w_hwio, W):
    """(3, 3, Ci, Co) HWIO conv weights -> (3, W*Ci, W*Co) banded matrices.

    out[h, wo*Co + co] = sum_dy  row(h+dy of vertically padded input) @ M[dy].
    Horizontal zero padding (pad=1) is folded into the band structure:
    out-of-range taps simply have no band entry.
    NOTE: hard-codes 3x3 / stride 1 / pad 1 semantics.
    """
    kh, kw, ci, co = w_hwio.shape
    m = jnp.zeros((kh, W * ci, W * co), jnp.float32)
    for dx in range(kw):
        for wo in range(W):
            wi = wo + dx - 1
            if 0 <= wi < W:
                m = m.at[:, wi * ci:(wi + 1) * ci,
                         wo * co:(wo + 1) * co].set(w_hwio[:, dx])
    return m


def inconv_forward(x_nchw, params):
    """inconv.forward (double_conv) on an NCHW input, one fused Pallas call."""
    # conv biases are accepted but unused: InstanceNorm's mean subtraction
    # cancels a per-channel constant exactly (validated vs reference below).
    (w1, _b1, g1, be1, w2, _b2, g2, be2) = params
    N, Cin, H, W = x_nchw.shape
    Cout = w1.shape[-1]

    x = jnp.transpose(x_nchw, (0, 2, 3, 1)).reshape(N, H, W * Cin)
    x = jnp.pad(x, ((0, 0), (1, 1), (0, 0)))        # vertical SAME pad rides the DMA
    m1 = _band_weights(w1, W)                       # (3, W*Cin,  W*Cout)
    m2 = _band_weights(w2, W)                       # (3, W*Cout, W*Cout)
    eye = jnp.eye(Cout, dtype=jnp.float32)
    p = jnp.tile(eye, (W, 1))                       # (W*Cout, Cout)
    pt = jnp.tile(eye, (1, W))                      # (Cout, W*Cout)
    gb = jnp.stack([g1.reshape(-1), be1.reshape(-1),
                    g2.reshape(-1), be2.reshape(-1)], axis=0)   # (4, Cout)

    y = pl.pallas_call(
        _double_conv_kernel,
        out_shape=jax.ShapeDtypeStruct((N, H, W * Cout), jnp.float32),
        grid_spec=pltpu.PrefetchScalarGridSpec(
            num_scalar_prefetch=0,
            grid=(N,),
            in_specs=[
                pl.BlockSpec((1, H + 2, W * Cin), lambda n: (n, 0, 0)),
                pl.BlockSpec((3, W * Cin, W * Cout), lambda n: (0, 0, 0)),
                pl.BlockSpec((3, W * Cout, W * Cout), lambda n: (0, 0, 0)),
                pl.BlockSpec((W * Cout, Cout), lambda n: (0, 0)),
                pl.BlockSpec((Cout, W * Cout), lambda n: (0, 0)),
                pl.BlockSpec((4, Cout), lambda n: (0, 0)),
            ],
            out_specs=pl.BlockSpec((1, H, W * Cout), lambda n: (n, 0, 0)),
            scratch_shapes=[
                pltpu.VMEM((H + 2, W * Cout), jnp.float32),
            ],
        ),
        compiler_params=pltpu.CompilerParams(
            dimension_semantics=("parallel",)),
    )(x, m1, m2, p, pt, gb)

    y = y.reshape(N, H, W, Cout)
    return jnp.transpose(y, (0, 3, 1, 2))           # NHWC -> NCHW


# ---------------- pure-JAX reference (for correctness check) ----------------
def _ref_block(x, w, b, g, beta):
    y = jax.lax.conv_general_dilated(
        x, w, window_strides=(1, 1), padding="SAME",
        dimension_numbers=("NHWC", "HWIO", "NHWC")) + b
    mean = jnp.mean(y, axis=(1, 2), keepdims=True)
    var = jnp.mean((y - mean) ** 2, axis=(1, 2), keepdims=True)
    y = (y - mean) * jax.lax.rsqrt(var + 1e-5) * g + beta
    return jnp.where(y >= 0, y, 0.01 * y)


def _ref_forward(x_nchw, params):
    (w1, b1, g1, be1, w2, b2, g2, be2) = params
    x = jnp.transpose(x_nchw, (0, 2, 3, 1))
    y = _ref_block(x, w1, b1, g1, be1)
    y = _ref_block(y, w2, b2, g2, be2)
    return jnp.transpose(y, (0, 3, 1, 2))


if __name__ == "__main__":
    N, Cin, Cout, H, W = 2, 4, 8, 16, 16
    key = jax.random.PRNGKey(0)
    ks = jax.random.split(key, 9)

    x_nchw = jax.random.normal(ks[0], (N, Cin, H, W), jnp.float32)

    # PyTorch Conv2d weight (Cout,Cin,3,3) represented in HWIO (3,3,Cin,Cout).
    w1 = 0.2 * jax.random.normal(ks[1], (3, 3, Cin, Cout), jnp.float32)
    b1 = 0.1 * jax.random.normal(ks[2], (Cout,), jnp.float32)
    g1 = 1.0 + 0.1 * jax.random.normal(ks[3], (Cout,), jnp.float32)
    be1 = 0.1 * jax.random.normal(ks[4], (Cout,), jnp.float32)
    w2 = 0.2 * jax.random.normal(ks[5], (3, 3, Cout, Cout), jnp.float32)
    b2 = 0.1 * jax.random.normal(ks[6], (Cout,), jnp.float32)
    g2 = 1.0 + 0.1 * jax.random.normal(ks[7], (Cout,), jnp.float32)
    be2 = 0.1 * jax.random.normal(ks[8], (Cout,), jnp.float32)
    params = (w1, b1, g1, be1, w2, b2, g2, be2)

    out = jax.block_until_ready(jax.jit(inconv_forward)(x_nchw, params))
    ref = jax.block_until_ready(_ref_forward(x_nchw, params))

    assert out.shape == (N, Cout, H, W)
    assert jnp.allclose(out, ref, rtol=2e-4, atol=2e-4), "mismatch vs reference"

    print("KERNEL_OK")
</pallas_src>

<mosaic_0001>
module attributes {stable_mosaic.version = 11 : i64} {
  func.func @_double_conv_kernel(%arg0: i32, %arg1: memref<1x18x64xf32, #tpu.memory_space<vmem>>, %arg2: memref<3x64x128xf32, #tpu.memory_space<vmem>>, %arg3: memref<3x128x128xf32, #tpu.memory_space<vmem>>, %arg4: memref<128x8xf32, #tpu.memory_space<vmem>>, %arg5: memref<8x128xf32, #tpu.memory_space<vmem>>, %arg6: memref<4x8xf32, #tpu.memory_space<vmem>>, %arg7: memref<1x16x128xf32, #tpu.memory_space<vmem>>, %arg8: memref<18x128xf32, #tpu.memory_space<vmem>>) attributes {dimension_semantics = [#tpu.dimension_semantics<parallel>], iteration_bounds = array<i64: 2>, scalar_prefetch = 0 : i64, scratch_operands = 1 : i64, tpu.core_type = #tpu.core_type<tc>, window_params = [{transform_indices = @transform_0, window_bounds = array<i64: 1, 18, 64>}, {pipeline_mode = #tpu.pipeline_mode<synchronous>, transform_indices = @transform_1, window_bounds = array<i64: 3, 64, 128>}, {pipeline_mode = #tpu.pipeline_mode<synchronous>, transform_indices = @transform_2, window_bounds = array<i64: 3, 128, 128>}, {pipeline_mode = #tpu.pipeline_mode<synchronous>, transform_indices = @transform_3, window_bounds = array<i64: 128, 8>}, {pipeline_mode = #tpu.pipeline_mode<synchronous>, transform_indices = @transform_4, window_bounds = array<i64: 8, 128>}, {pipeline_mode = #tpu.pipeline_mode<synchronous>, transform_indices = @transform_5, window_bounds = array<i64: 4, 8>}, {transform_indices = @transform_6, window_bounds = array<i64: 1, 16, 128>}]} {
    %cst = arith.constant 0.000000e+00 : f32
    %0 = vector.broadcast %cst : f32 to vector<1x128xf32>
    %c0 = arith.constant 0 : index
    %c0_0 = arith.constant 0 : index
    %1 = vector.load %arg8[%c0, %c0_0] : memref<18x128xf32, #tpu.memory_space<vmem>>, vector<1x128xf32>
    tpu.vector_store %arg8[%c0, %c0_0], %0 {strides = array<i32>} : memref<18x128xf32, #tpu.memory_space<vmem>>, vector<1x128xf32>,
    %c17 = arith.constant 17 : index
    %c0_1 = arith.constant 0 : index
    %2 = vector.load %arg8[%c17, %c0_1] : memref<18x128xf32, #tpu.memory_space<vmem>>, vector<1x128xf32>
    tpu.vector_store %arg8[%c17, %c0_1], %0 {strides = array<i32>} : memref<18x128xf32, #tpu.memory_space<vmem>>, vector<1x128xf32>,
    %c0_2 = arith.constant 0 : index
    %c0_3 = arith.constant 0 : index
    %c0_4 = arith.constant 0 : index
    %3 = vector.load %arg1[%c0_2, %c0_3, %c0_4] : memref<1x18x64xf32, #tpu.memory_space<vmem>>, vector<1x16x64xf32>
    %4 = vector.shape_cast %3 : vector<1x16x64xf32> to vector<16x64xf32>
    %c0_5 = arith.constant 0 : index
    %c0_6 = arith.constant 0 : index
    %c0_7 = arith.constant 0 : index
    %5 = vector.load %arg2[%c0_5, %c0_6, %c0_7] : memref<3x64x128xf32, #tpu.memory_space<vmem>>, vector<1x64x128xf32>
    %6 = vector.shape_cast %5 : vector<1x64x128xf32> to vector<64x128xf32>
    %cst_8 = arith.constant dense<0.000000e+00> : vector<16x128xf32>
    %7 = tpu.matmul %4, %6, %cst_8 {dimension_numbers = #tpu.dot_dimension_numbers<[1], [0], [0], [1], [0, 0, 1, 1], [], []>} : vector<16x64xf32>, vector<64x128xf32>, vector<16x128xf32> -> vector<16x128xf32>
    %c0_9 = arith.constant 0 : index
    %c1 = arith.constant 1 : index
    %c0_10 = arith.constant 0 : index
    %8 = vector.load %arg1[%c0_9, %c1, %c0_10] : memref<1x18x64xf32, #tpu.memory_space<vmem>>, vector<1x16x64xf32>
    %9 = vector.shape_cast %8 : vector<1x16x64xf32> to vector<16x64xf32>
    %c1_11 = arith.constant 1 : index
    %c0_12 = arith.constant 0 : index
    %c0_13 = arith.constant 0 : index
    %10 = vector.load %arg2[%c1_11, %c0_12, %c0_13] : memref<3x64x128xf32, #tpu.memory_space<vmem>>, vector<1x64x128xf32>
    %11 = vector.shape_cast %10 : vector<1x64x128xf32> to vector<64x128xf32>
    %cst_14 = arith.constant dense<0.000000e+00> : vector<16x128xf32>
    %12 = tpu.matmul %9, %11, %cst_14 {dimension_numbers = #tpu.dot_dimension_numbers<[1], [0], [0], [1], [0, 0, 1, 1], [], []>} : vector<16x64xf32>, vector<64x128xf32>, vector<16x128xf32> -> vector<16x128xf32>
    %13 = arith.addf %7, %12 : vector<16x128xf32>
    %c0_15 = arith.constant 0 : index
    %c2 = arith.constant 2 : index
    %c0_16 = arith.constant 0 : index
    %14 = vector.load %arg1[%c0_15, %c2, %c0_16] : memref<1x18x64xf32, #tpu.memory_space<vmem>>, vector<1x16x64xf32>
    %15 = vector.shape_cast %14 : vector<1x16x64xf32> to vector<16x64xf32>
    %c2_17 = arith.constant 2 : index
    %c0_18 = arith.constant 0 : index
    %c0_19 = arith.constant 0 : index
    %16 = vector.load %arg2[%c2_17, %c0_18, %c0_19] : memref<3x64x128xf32, #tpu.memory_space<vmem>>, vector<1x64x128xf32>
    %17 = vector.shape_cast %16 : vector<1x64x128xf32> to vector<64x128xf32>
    %cst_20 = arith.constant dense<0.000000e+00> : vector<16x128xf32>
    %18 = tpu.matmul %15, %17, %cst_20 {dimension_numbers = #tpu.dot_dimension_numbers<[1], [0], [0], [1], [0, 0, 1, 1], [], []>} : vector<16x64xf32>, vector<64x128xf32>, vector<16x128xf32> -> vector<16x128xf32>
    %19 = arith.addf %13, %18 : vector<16x128xf32>
    %c0_21 = arith.constant 0 : index
    %c0_22 = arith.constant 0 : index
    %20 = vector.load %arg6[%c0_21, %c0_22] : memref<4x8xf32, #tpu.memory_space<vmem>>, vector<1x8xf32>
    %c1_23 = arith.constant 1 : index
    %c0_24 = arith.constant 0 : index
    %21 = vector.load %arg6[%c1_23, %c0_24] : memref<4x8xf32, #tpu.memory_space<vmem>>, vector<1x8xf32>
    %cst_25 = arith.constant dense<0.000000e+00> : vector<128xf32>
    %22 = vector.multi_reduction <add>, %19, %cst_25 [0] : vector<16x128xf32> to vector<128xf32>
    %23 = vector.shape_cast %22 : vector<128xf32> to vector<1x128xf32>
    %24 = arith.mulf %19, %19 : vector<16x128xf32>
    %cst_26 = arith.constant dense<0.000000e+00> : vector<128xf32>
    %25 = vector.multi_reduction <add>, %24, %cst_26 [0] : vector<16x128xf32> to vector<128xf32>
    %26 = vector.shape_cast %25 : vector<128xf32> to vector<1x128xf32>
    %27 = tpu.concatenate %23, %26 in 0 : vector<1x128xf32>, vector<1x128xf32> -> vector<2x128xf32>
    %c0_27 = arith.constant 0 : index
    %c0_28 = arith.constant 0 : index
    %28 = vector.load %arg4[%c0_27, %c0_28] : memref<128x8xf32, #tpu.memory_space<vmem>>, vector<128x8xf32>
    %cst_29 = arith.constant dense<0.000000e+00> : vector<2x8xf32>
    %29 = tpu.matmul %27, %28, %cst_29 {dimension_numbers = #tpu.dot_dimension_numbers<[1], [0], [0], [1], [0, 0, 1, 1], [], []>} : vector<2x128xf32>, vector<128x8xf32>, vector<2x8xf32> -> vector<2x8xf32>
    %cst_30 = arith.constant 3.906250e-03 : f32
    %30 = vector.broadcast %cst_30 : f32 to vector<2x8xf32>
    %31 = arith.mulf %29, %30 : vector<2x8xf32>
    %32 = vector.extract_strided_slice %31 {offsets = [0, 0], sizes = [1, 8], strides = [1, 1]} : vector<2x8xf32> to vector<1x8xf32>
    %33 = vector.extract_strided_slice %31 {offsets = [1, 0], sizes = [1, 8], strides = [1, 1]} : vector<2x8xf32> to vector<1x8xf32>
    %34 = arith.mulf %32, %32 : vector<1x8xf32>
    %35 = arith.subf %33, %34 : vector<1x8xf32>
    %cst_31 = arith.constant 9.99999974E-6 : f32
    %36 = vector.broadcast %cst_31 : f32 to vector<1x8xf32>
    %37 = arith.addf %35, %36 : vector<1x8xf32>
    %38 = math.rsqrt %37 : vector<1x8xf32>
    %39 = arith.mulf %20, %38 : vector<1x8xf32>
    %40 = arith.mulf %32, %39 : vector<1x8xf32>
    %41 = arith.subf %21, %40 : vector<1x8xf32>
    %42 = tpu.concatenate %39, %41 in 0 : vector<1x8xf32>, vector<1x8xf32> -> vector<2x8xf32>
    %c0_32 = arith.constant 0 : index
    %c0_33 = arith.constant 0 : index
    %43 = vector.load %arg5[%c0_32, %c0_33] : memref<8x128xf32, #tpu.memory_space<vmem>>, vector<8x128xf32>
    %cst_34 = arith.constant dense<0.000000e+00> : vector<2x128xf32>
    %44 = tpu.matmul %42, %43, %cst_34 {dimension_numbers = #tpu.dot_dimension_numbers<[1], [0], [0], [1], [0, 0, 1, 1], [], []>} : vector<2x8xf32>, vector<8x128xf32>, vector<2x128xf32> -> vector<2x128xf32>
    %45 = vector.extract_strided_slice %44 {offsets = [0, 0], sizes = [1, 128], strides = [1, 1]} : vector<2x128xf32> to vector<1x128xf32>
    %46 = vector.broadcast %45 : vector<1x128xf32> to vector<16x128xf32>
    %47 = arith.mulf %19, %46 : vector<16x128xf32>
    %48 = vector.extract_strided_slice %44 {offsets = [1, 0], sizes = [1, 128], strides = [1, 1]} : vector<2x128xf32> to vector<1x128xf32>
    %49 = vector.broadcast %48 : vector<1x128xf32> to vector<16x128xf32>
    %50 = arith.addf %47, %49 : vector<16x128xf32>
    %cst_35 = arith.constant 0.000000e+00 : f32
    %51 = vector.broadcast %cst_35 : f32 to vector<16x128xf32>
    %52 = arith.cmpf oge, %50, %51 : vector<16x128xf32>
    %cst_36 = arith.constant 0.00999999977 : f32
    %53 = vector.broadcast %cst_36 : f32 to vector<16x128xf32>
    %54 = arith.mulf %53, %50 : vector<16x128xf32>
    %55 = arith.select %52, %50, %54 : vector<16x128xi1>, vector<16x128xf32>
    %c1_37 = arith.constant 1 : index
    %c0_38 = arith.constant 0 : index
    %56 = vector.load %arg8[%c1_37, %c0_38] : memref<18x128xf32, #tpu.memory_space<vmem>>, vector<16x128xf32>
    tpu.vector_store %arg8[%c1_37, %c0_38], %55 {strides = array<i32>} : memref<18x128xf32, #tpu.memory_space<vmem>>, vector<16x128xf32>,
    %c0_39 = arith.constant 0 : index
    %c0_40 = arith.constant 0 : index
    %57 = vector.load %arg8[%c0_39, %c0_40] : memref<18x128xf32, #tpu.memory_space<vmem>>, vector<16x128xf32>
    %c0_41 = arith.constant 0 : index
    %c0_42 = arith.constant 0 : index
    %c0_43 = arith.constant 0 : index
    %58 = vector.load %arg3[%c0_41, %c0_42, %c0_43] : memref<3x128x128xf32, #tpu.memory_space<vmem>>, vector<1x128x128xf32>
    %59 = vector.shape_cast %58 : vector<1x128x128xf32> to vector<128x128xf32>
    %cst_44 = arith.constant dense<0.000000e+00> : vector<16x128xf32>
    %60 = tpu.matmul %57, %59, %cst_44 {dimension_numbers = #tpu.dot_dimension_numbers<[1], [0], [0], [1], [0, 0, 1, 1], [], []>} : vector<16x128xf32>, vector<128x128xf32>, vector<16x128xf32> -> vector<16x128xf32>
    %c1_45 = arith.constant 1 : index
    %c0_46 = arith.constant 0 : index
    %61 = vector.load %arg8[%c1_45, %c0_46] : memref<18x128xf32, #tpu.memory_space<vmem>>, vector<16x128xf32>
    %c1_47 = arith.constant 1 : index
    %c0_48 = arith.constant 0 : index
    %c0_49 = arith.constant 0 : index
    %62 = vector.load %arg3[%c1_47, %c0_48, %c0_49] : memref<3x128x128xf32, #tpu.memory_space<vmem>>, vector<1x128x128xf32>
    %63 = vector.shape_cast %62 : vector<1x128x128xf32> to vector<128x128xf32>
    %cst_50 = arith.constant dense<0.000000e+00> : vector<16x128xf32>
    %64 = tpu.matmul %61, %63, %cst_50 {dimension_numbers = #tpu.dot_dimension_numbers<[1], [0], [0], [1], [0, 0, 1, 1], [], []>} : vector<16x128xf32>, vector<128x128xf32>, vector<16x128xf32> -> vector<16x128xf32>
    %65 = arith.addf %60, %64 : vector<16x128xf32>
    %c2_51 = arith.constant 2 : index
    %c0_52 = arith.constant 0 : index
    %66 = vector.load %arg8[%c2_51, %c0_52] : memref<18x128xf32, #tpu.memory_space<vmem>>, vector<16x128xf32>
    %c2_53 = arith.constant 2 : index
    %c0_54 = arith.constant 0 : index
    %c0_55 = arith.constant 0 : index
    %67 = vector.load %arg3[%c2_53, %c0_54, %c0_55] : memref<3x128x128xf32, #tpu.memory_space<vmem>>, vector<1x128x128xf32>
    %68 = vector.shape_cast %67 : vector<1x128x128xf32> to vector<128x128xf32>
    %cst_56 = arith.constant dense<0.000000e+00> : vector<16x128xf32>
    %69 = tpu.matmul %66, %68, %cst_56 {dimension_numbers = #tpu.dot_dimension_numbers<[1], [0], [0], [1], [0, 0, 1, 1], [], []>} : vector<16x128xf32>, vector<128x128xf32>, vector<16x128xf32> -> vector<16x128xf32>
    %70 = arith.addf %65, %69 : vector<16x128xf32>
    %c2_57 = arith.constant 2 : index
    %c0_58 = arith.constant 0 : index
    %71 = vector.load %arg6[%c2_57, %c0_58] : memref<4x8xf32, #tpu.memory_space<vmem>>, vector<1x8xf32>
    %c3 = arith.constant 3 : index
    %c0_59 = arith.constant 0 : index
    %72 = vector.load %arg6[%c3, %c0_59] : memref<4x8xf32, #tpu.memory_space<vmem>>, vector<1x8xf32>
    %cst_60 = arith.constant dense<0.000000e+00> : vector<128xf32>
    %73 = vector.multi_reduction <add>, %70, %cst_60 [0] : vector<16x128xf32> to vector<128xf32>
    %74 = vector.shape_cast %73 : vector<128xf32> to vector<1x128xf32>
    %75 = arith.mulf %70, %70 : vector<16x128xf32>
    %cst_61 = arith.constant dense<0.000000e+00> : vector<128xf32>
    %76 = vector.multi_reduction <add>, %75, %cst_61 [0] : vector<16x128xf32> to vector<128xf32>
    %77 = vector.shape_cast %76 : vector<128xf32> to vector<1x128xf32>
    %78 = tpu.concatenate %74, %77 in 0 : vector<1x128xf32>, vector<1x128xf32> -> vector<2x128xf32>
    %c0_62 = arith.constant 0 : index
    %c0_63 = arith.constant 0 : index
    %79 = vector.load %arg4[%c0_62, %c0_63] : memref<128x8xf32, #tpu.memory_space<vmem>>, vector<128x8xf32>
    %cst_64 = arith.constant dense<0.000000e+00> : vector<2x8xf32>
    %80 = tpu.matmul %78, %79, %cst_64 {dimension_numbers = #tpu.dot_dimension_numbers<[1], [0], [0], [1], [0, 0, 1, 1], [], []>} : vector<2x128xf32>, vector<128x8xf32>, vector<2x8xf32> -> vector<2x8xf32>
    %cst_65 = arith.constant 3.906250e-03 : f32
    %81 = vector.broadcast %cst_65 : f32 to vector<2x8xf32>
    %82 = arith.mulf %80, %81 : vector<2x8xf32>
    %83 = vector.extract_strided_slice %82 {offsets = [0, 0], sizes = [1, 8], strides = [1, 1]} : vector<2x8xf32> to vector<1x8xf32>
    %84 = vector.extract_strided_slice %82 {offsets = [1, 0], sizes = [1, 8], strides = [1, 1]} : vector<2x8xf32> to vector<1x8xf32>
    %85 = arith.mulf %83, %83 : vector<1x8xf32>
    %86 = arith.subf %84, %85 : vector<1x8xf32>
    %cst_66 = arith.constant 9.99999974E-6 : f32
    %87 = vector.broadcast %cst_66 : f32 to vector<1x8xf32>
    %88 = arith.addf %86, %87 : vector<1x8xf32>
    %89 = math.rsqrt %88 : vector<1x8xf32>
    %90 = arith.mulf %71, %89 : vector<1x8xf32>
    %91 = arith.mulf %83, %90 : vector<1x8xf32>
    %92 = arith.subf %72, %91 : vector<1x8xf32>
    %93 = tpu.concatenate %90, %92 in 0 : vector<1x8xf32>, vector<1x8xf32> -> vector<2x8xf32>
    %c0_67 = arith.constant 0 : index
    %c0_68 = arith.constant 0 : index
    %94 = vector.load %arg5[%c0_67, %c0_68] : memref<8x128xf32, #tpu.memory_space<vmem>>, vector<8x128xf32>
    %cst_69 = arith.constant dense<0.000000e+00> : vector<2x128xf32>
    %95 = tpu.matmul %93, %94, %cst_69 {dimension_numbers = #tpu.dot_dimension_numbers<[1], [0], [0], [1], [0, 0, 1, 1], [], []>} : vector<2x8xf32>, vector<8x128xf32>, vector<2x128xf32> -> vector<2x128xf32>
    %96 = vector.extract_strided_slice %95 {offsets = [0, 0], sizes = [1, 128], strides = [1, 1]} : vector<2x128xf32> to vector<1x128xf32>
    %97 = vector.broadcast %96 : vector<1x128xf32> to vector<16x128xf32>
    %98 = arith.mulf %70, %97 : vector<16x128xf32>
    %99 = vector.extract_strided_slice %95 {offsets = [1, 0], sizes = [1, 128], strides = [1, 1]} : vector<2x128xf32> to vector<1x128xf32>
    %100 = vector.broadcast %99 : vector<1x128xf32> to vector<16x128xf32>
    %101 = arith.addf %98, %100 : vector<16x128xf32>
    %cst_70 = arith.constant 0.000000e+00 : f32
    %102 = vector.broadcast %cst_70 : f32 to vector<16x128xf32>
    %103 = arith.cmpf oge, %101, %102 : vector<16x128xf32>
    %cst_71 = arith.constant 0.00999999977 : f32
    %104 = vector.broadcast %cst_71 : f32 to vector<16x128xf32>
    %105 = arith.mulf %104, %101 : vector<16x128xf32>
    %106 = arith.select %103, %101, %105 : vector<16x128xi1>, vector<16x128xf32>
    %c0_72 = arith.constant 0 : index
    %c0_73 = arith.constant 0 : index
    %c0_74 = arith.constant 0 : index
    %107 = vector.load %arg7[%c0_72, %c0_73, %c0_74] : memref<1x16x128xf32, #tpu.memory_space<vmem>>, vector<1x16x128xf32>
    %108 = vector.shape_cast %107 : vector<1x16x128xf32> to vector<16x128xf32>
    %109 = vector.shape_cast %106 : vector<16x128xf32> to vector<1x16x128xf32>
    tpu.vector_store %arg7[%c0_72, %c0_73, %c0_74], %109 {strides = array<i32>} : memref<1x16x128xf32, #tpu.memory_space<vmem>>, vector<1x16x128xf32>,
    return
  }
  func.func @transform_0(%arg0: i32) -> (i32, i32, i32) {
    %c0_i32 = arith.constant 0 : i32
    %c0_i32_0 = arith.constant 0 : i32
    %c0_i32_1 = arith.constant 0 : i32
    return %arg0, %c0_i32, %c0_i32_0 : i32, i32, i32
  }
  func.func @transform_1(%arg0: i32) -> (i32, i32, i32) {
    %c0_i32 = arith.constant 0 : i32
    %c0_i32_0 = arith.constant 0 : i32
    %c0_i32_1 = arith.constant 0 : i32
    %c0_i32_2 = arith.constant 0 : i32
    return %c0_i32, %c0_i32_0, %c0_i32_1 : i32, i32, i32
  }
  func.func @transform_2(%arg0: i32) -> (i32, i32, i32) {
    %c0_i32 = arith.constant 0 : i32
    %c0_i32_0 = arith.constant 0 : i32
    %c0_i32_1 = arith.constant 0 : i32
    %c0_i32_2 = arith.constant 0 : i32
    return %c0_i32, %c0_i32_0, %c0_i32_1 : i32, i32, i32
  }
  func.func @transform_3(%arg0: i32) -> (i32, i32) {
    %c0_i32 = arith.constant 0 : i32
    %c0_i32_0 = arith.constant 0 : i32
    %c0_i32_1 = arith.constant 0 : i32
    return %c0_i32, %c0_i32_0 : i32, i32
  }
  func.func @transform_4(%arg0: i32) -> (i32, i32) {
    %c0_i32 = arith.constant 0 : i32
    %c0_i32_0 = arith.constant 0 : i32
    %c0_i32_1 = arith.constant 0 : i32
    return %c0_i32, %c0_i32_0 : i32, i32
  }
  func.func @transform_5(%arg0: i32) -> (i32, i32) {
    %c0_i32 = arith.constant 0 : i32
    %c0_i32_0 = arith.constant 0 : i32
    %c0_i32_1 = arith.constant 0 : i32
    return %c0_i32, %c0_i32_0 : i32, i32
  }
  func.func @transform_6(%arg0: i32) -> (i32, i32, i32) {
    %c0_i32 = arith.constant 0 : i32
    %c0_i32_0 = arith.constant 0 : i32
    %c0_i32_1 = arith.constant 0 : i32
    return %arg0, %c0_i32, %c0_i32_0 : i32, i32, i32
  }
}

</mosaic_0001>

<llo_original>
// kernel: tile.19
$region0: #{tile.19}
  %s0 = inlined_call_operand.vmem [shape: f32[8,16,8], index: 0, kind: input, shape index: {}]
  %s1 = inlined_call_operand.vmem [shape: f32[8,128], index: 1, kind: output, shape index: {}]
  %s2 = smov 3
  %v3 = vld [vmem:[%s0] ss:$16 sm:%s2]
  %s4 = smov 12
  %v5 = vld [vmem:[%s0] ss:$16 sm:%s4]
  %vm6 = vcmask 1043458
  %v7 = vsel %vm6, %v5, %v3
  %s8 = smov 48
  %v9 = vld [vmem:[%s0] ss:$16 sm:%s8]
  %vm10 = vcmask 1045508
  %v11 = vsel %vm10, %v9, %v7
  %s12 = smov 192
  %v13 = vld [vmem:[%s0] ss:$16 sm:%s12]
  %vm14 = vcmask 1047558
  %v15 = vsel %vm14, %v13, %v11
  %vm16 = vcmask 64512
  %17 = vst.msk [vmem:[%s1] sm:$0xff] %vm16, %v15
  %s18 = scalar_lea.vmem %s0, 15
  %s19 = smov 3
  %v20 = vld [vmem:[%s18] ss:$16 sm:%s19]
  %s21 = scalar_lea.vmem %s0, 15
  %s22 = smov 12
  %v23 = vld [vmem:[%s21] ss:$16 sm:%s22]
  %vm24 = vcmask 1043458
  %v25 = vsel %vm24, %v23, %v20
  %s26 = scalar_lea.vmem %s0, 15
  %s27 = smov 48
  %v28 = vld [vmem:[%s26] ss:$16 sm:%s27]
  %vm29 = vcmask 1045508
  %v30 = vsel %vm29, %v28, %v25
  %s31 = scalar_lea.vmem %s0, 15
  %s32 = smov 192
  %v33 = vld [vmem:[%s31] ss:$16 sm:%s32]
  %vm34 = vcmask 1047558
  %v35 = vsel %vm34, %v33, %v30
  %36 = vrot.lane.b32.xlu0 %v35, 120
  %v37 = vpop.permute.xlu0 %36
  %vm38 = vcmask 1048512
  %39 = vst.msk [vmem:[%s1] sm:$0xff] %vm38, %v37
  %s40 = scalar_lea.vmem %s0, 14
  %s41 = smov 3
  %v42 = vld [vmem:[%s40] ss:$16 sm:%s41]
  %s43 = scalar_lea.vmem %s0, 14
  %s44 = smov 12
  %v45 = vld [vmem:[%s43] ss:$16 sm:%s44]
  %vm46 = vcmask 1043458
  %v47 = vsel %vm46, %v45, %v42
  %s48 = scalar_lea.vmem %s0, 14
  %s49 = smov 48
  %v50 = vld [vmem:[%s48] ss:$16 sm:%s49]
  %vm51 = vcmask 1045508
  %v52 = vsel %vm51, %v50, %v47
  %s53 = scalar_lea.vmem %s0, 14
  %s54 = smov 192
  %v55 = vld [vmem:[%s53] ss:$16 sm:%s54]
  %vm56 = vcmask 1047558
  %v57 = vsel %vm56, %v55, %v52
  %58 = vrot.lane.b32.xlu0 %v57, 112
  %v59 = vpop.permute.xlu0 %58
  %vm60 = vcmask 982912
  %61 = vst.msk [vmem:[%s1] sm:$0xff] %vm60, %v59
  %s62 = scalar_lea.vmem %s0, 13
  %s63 = smov 3
  %v64 = vld [vmem:[%s62] ss:$16 sm:%s63]
  %s65 = scalar_lea.vmem %s0, 13
  %s66 = smov 12
  %v67 = vld [vmem:[%s65] ss:$16 sm:%s66]
  %vm68 = vcmask 1043458
  %v69 = vsel %vm68, %v67, %v64
  %s70 = scalar_lea.vmem %s0, 13
  %s71 = smov 48
  %v72 = vld [vmem:[%s70] ss:$16 sm:%s71]
  %vm73 = vcmask 1045508
  %v74 = vsel %vm73, %v72, %v69
  %s75 = scalar_lea.vmem %s0, 13
  %s76 = smov 192
  %v77 = vld [vmem:[%s75] ss:$16 sm:%s76]
  %vm78 = vcmask 1047558
  %v79 = vsel %vm78, %v77, %v74
  %80 = vrot.lane.b32.xlu0 %v79, 104
  %v81 = vpop.permute.xlu0 %80
  %vm82 = vcmask 917312
  %83 = vst.msk [vmem:[%s1] sm:$0xff] %vm82, %v81
  %s84 = scalar_lea.vmem %s0, 12
  %s85 = smov 3
  %v86 = vld [vmem:[%s84] ss:$16 sm:%s85]
  %s87 = scalar_lea.vmem %s0, 12
  %s88 = smov 12
  %v89 = vld [vmem:[%s87] ss:$16 sm:%s88]
  %vm90 = vcmask 1043458
  %v91 = vsel %vm90, %v89, %v86
  %s92 = scalar_lea.vmem %s0, 12
  %s93 = smov 48
  %v94 = vld [vmem:[%s92] ss:$16 sm:%s93]
  %vm95 = vcmask 1045508
  %v96 = vsel %vm95, %v94, %v91
  %s97 = scalar_lea.vmem %s0, 12
  %s98 = smov 192
  %v99 = vld [vmem:[%s97] ss:$16 sm:%s98]
  %vm100 = vcmask 1047558
  %v101 = vsel %vm100, %v99, %v96
  %102 = vrot.lane.b32.xlu0 %v101, 96
  %v103 = vpop.permute.xlu0 %102
  %vm104 = vcmask 851712
  %105 = vst.msk [vmem:[%s1] sm:$0xff] %vm104, %v103
  %s106 = scalar_lea.vmem %s0, 11
  %s107 = smov 3
  %v108 = vld [vmem:[%s106] ss:$16 sm:%s107]
  %s109 = scalar_lea.vmem %s0, 11
  %s110 = smov 12
  %v111 = vld [vmem:[%s109] ss:$16 sm:%s110]
  %vm112 = vcmask 1043458
  %v113 = vsel %vm112, %v111, %v108
  %s114 = scalar_lea.vmem %s0, 11
  %s115 = smov 48
  %v116 = vld [vmem:[%s114] ss:$16 sm:%s115]
  %vm117 = vcmask 1045508
  %v118 = vsel %vm117, %v116, %v113
  %s119 = scalar_lea.vmem %s0, 11
  %s120 = smov 192
  %v121 = vld [vmem:[%s119] ss:$16 sm:%s120]
  %vm122 = vcmask 1047558
  %v123 = vsel %vm122, %v121, %v118
  %124 = vrot.lane.b32.xlu0 %v123, 88
  %v125 = vpop.permute.xlu0 %124
  %vm126 = vcmask 786112
  %127 = vst.msk [vmem:[%s1] sm:$0xff] %vm126, %v125
  %s128 = scalar_lea.vmem %s0, 10
  %s129 = smov 3
  %v130 = vld [vmem:[%s128] ss:$16 sm:%s129]
  %s131 = scalar_lea.vmem %s0, 10
  %s132 = smov 12
  %v133 = vld [vmem:[%s131] ss:$16 sm:%s132]
  %vm134 = vcmask 1043458
  %v135 = vsel %vm134, %v133, %v130
  %s136 = scalar_lea.vmem %s0, 10
  %s137 = smov 48
  %v138 = vld [vmem:[%s136] ss:$16 sm:%s137]
  %vm139 = vcmask 1045508
  %v140 = vsel %vm139, %v138, %v135
  %s141 = scalar_lea.vmem %s0, 10
  %s142 = smov 192
  %v143 = vld [vmem:[%s141] ss:$16 sm:%s142]
  %vm144 = vcmask 1047558
  %v145 = vsel %vm144, %v143, %v140
  %146 = vrot.lane.b32.xlu0 %v145, 80
  %v147 = vpop.permute.xlu0 %146
  %vm148 = vcmask 720512
  %149 = vst.msk [vmem:[%s1] sm:$0xff] %vm148, %v147
  %s150 = scalar_lea.vmem %s0, 9
  %s151 = smov 3
  %v152 = vld [vmem:[%s150] ss:$16 sm:%s151]
  %s153 = scalar_lea.vmem %s0, 9
  %s154 = smov 12
  %v155 = vld [vmem:[%s153] ss:$16 sm:%s154]
  %vm156 = vcmask 1043458
  %v157 = vsel %vm156, %v155, %v152
  %s158 = scalar_lea.vmem %s0, 9
  %s159 = smov 48
  %v160 = vld [vmem:[%s158] ss:$16 sm:%s159]
  %vm161 = vcmask 1045508
  %v162 = vsel %vm161, %v160, %v157
  %s163 = scalar_lea.vmem %s0, 9
  %s164 = smov 192
  %v165 = vld [vmem:[%s163] ss:$16 sm:%s164]
  %vm166 = vcmask 1047558
  %v167 = vsel %vm166, %v165, %v162
  %168 = vrot.lane.b32.xlu0 %v167, 72
  %v169 = vpop.permute.xlu0 %168
  %vm170 = vcmask 654912
  %171 = vst.msk [vmem:[%s1] sm:$0xff] %vm170, %v169
  %s172 = scalar_lea.vmem %s0, 8
  %s173 = smov 3
  %v174 = vld [vmem:[%s172] ss:$16 sm:%s173]
  %s175 = scalar_lea.vmem %s0, 8
  %s176 = smov 12
  %v177 = vld [vmem:[%s175] ss:$16 sm:%s176]
  %vm178 = vcmask 1043458
  %v179 = vsel %vm178, %v177, %v174
  %s180 = scalar_lea.vmem %s0, 8
  %s181 = smov 48
  %v182 = vld [vmem:[%s180] ss:$16 sm:%s181]
  %vm183 = vcmask 1045508
  %v184 = vsel %vm183, %v182, %v179
  %s185 = scalar_lea.vmem %s0, 8
  %s186 = smov 192
  %v187 = vld [vmem:[%s185] ss:$16 sm:%s186]
  %vm188 = vcmask 1047558
  %v189 = vsel %vm188, %v187, %v184
  %190 = vrot.lane.b32.xlu0 %v189, 64
  %v191 = vpop.permute.xlu0 %190
  %vm192 = vcmask 589312
  %193 = vst.msk [vmem:[%s1] sm:$0xff] %vm192, %v191
  %s194 = scalar_lea.vmem %s0, 7
  %s195 = smov 3
  %v196 = vld [vmem:[%s194] ss:$16 sm:%s195]
  %s197 = scalar_lea.vmem %s0, 7
  %s198 = smov 12
  %v199 = vld [vmem:[%s197] ss:$16 sm:%s198]
  %vm200 = vcmask 1043458
  %v201 = vsel %vm200, %v199, %v196
  %s202 = scalar_lea.vmem %s0, 7
  %s203 = smov 48
  %v204 = vld [vmem:[%s202] ss:$16 sm:%s203]
  %vm205 = vcmask 1045508
  %v206 = vsel %vm205, %v204, %v201
  %s207 = scalar_lea.vmem %s0, 7
  %s208 = smov 192
  %v209 = vld [vmem:[%s207] ss:$16 sm:%s208]
  %vm210 = vcmask 1047558
  %v211 = vsel %vm210, %v209, %v206
  %212 = vrot.lane.b32.xlu0 %v211, 56
  %v213 = vpop.permute.xlu0 %212
  %vm214 = vcmask 523712
  %215 = vst.msk [vmem:[%s1] sm:$0xff] %vm214, %v213
  %s216 = scalar_lea.vmem %s0, 6
  %s217 = smov 3
  %v218 = vld [vmem:[%s216] ss:$16 sm:%s217]
  %s219 = scalar_lea.vmem %s0, 6
  %s220 = smov 12
  %v221 = vld [vmem:[%s219] ss:$16 sm:%s220]
  %vm222 = vcmask 1043458
  %v223 = vsel %vm222, %v221, %v218
  %s224 = scalar_lea.vmem %s0, 6
  %s225 = smov 48
  %v226 = vld [vmem:[%s224] ss:$16 sm:%s225]
  %vm227 = vcmask 1045508
  %v228 = vsel %vm227, %v226, %v223
  %s229 = scalar_lea.vmem %s0, 6
  %s230 = smov 192
  %v231 = vld [vmem:[%s229] ss:$16 sm:%s230]
  %vm232 = vcmask 1047558
  %v233 = vsel %vm232, %v231, %v228
  %234 = vrot.lane.b32.xlu0 %v233, 48
  %v235 = vpop.permute.xlu0 %234
  %vm236 = vcmask 458112
  %237 = vst.msk [vmem:[%s1] sm:$0xff] %vm236, %v235
  %s238 = scalar_lea.vmem %s0, 5
  %s239 = smov 3
  %v240 = vld [vmem:[%s238] ss:$16 sm:%s239]
  %s241 = scalar_lea.vmem %s0, 5
  %s242 = smov 12
  %v243 = vld [vmem:[%s241] ss:$16 sm:%s242]
  %vm244 = vcmask 1043458
  %v245 = vsel %vm244, %v243, %v240
  %s246 = scalar_lea.vmem %s0, 5
  %s247 = smov 48
  %v248 = vld [vmem:[%s246] ss:$16 sm:%s247]
  %vm249 = vcmask 1045508
  %v250 = vsel %vm249, %v248, %v245
  %s251 = scalar_lea.vmem %s0, 5
  %s252 = smov 192
  %v253 = vld [vmem:[%s251] ss:$16 sm:%s252]
  %vm254 = vcmask 1047558
  %v255 = vsel %vm254, %v253, %v250
  %256 = vrot.lane.b32.xlu0 %v255, 40
  %v257 = vpop.permute.xlu0 %256
  %vm258 = vcmask 392512
  %259 = vst.msk [vmem:[%s1] sm:$0xff] %vm258, %v257
  %s260 = scalar_lea.vmem %s0, 4
  %s261 = smov 3
  %v262 = vld [vmem:[%s260] ss:$16 sm:%s261]
  %s263 = scalar_lea.vmem %s0, 4
  %s264 = smov 12
  %v265 = vld [vmem:[%s263] ss:$16 sm:%s264]
  %vm266 = vcmask 1043458
  %v267 = vsel %vm266, %v265, %v262
  %s268 = scalar_lea.vmem %s0, 4
  %s269 = smov 48
  %v270 = vld [vmem:[%s268] ss:$16 sm:%s269]
  %vm271 = vcmask 1045508
  %v272 = vsel %vm271, %v270, %v267
  %s273 = scalar_lea.vmem %s0, 4
  %s274 = smov 192
  %v275 = vld [vmem:[%s273] ss:$16 sm:%s274]
  %vm276 = vcmask 1047558
  %v277 = vsel %vm276, %v275, %v272
  %278 = vrot.lane.b32.xlu0 %v277, 32
  %v279 = vpop.permute.xlu0 %278
  %vm280 = vcmask 326912
  %281 = vst.msk [vmem:[%s1] sm:$0xff] %vm280, %v279
  %s282 = scalar_lea.vmem %s0, 3
  %s283 = smov 3
  %v284 = vld [vmem:[%s282] ss:$16 sm:%s283]
  %s285 = scalar_lea.vmem %s0, 3
  %s286 = smov 12
  %v287 = vld [vmem:[%s285] ss:$16 sm:%s286]
  %vm288 = vcmask 1043458
  %v289 = vsel %vm288, %v287, %v284
  %s290 = scalar_lea.vmem %s0, 3
  %s291 = smov 48
  %v292 = vld [vmem:[%s290] ss:$16 sm:%s291]
  %vm293 = vcmask 1045508
  %v294 = vsel %vm293, %v292, %v289
  %s295 = scalar_lea.vmem %s0, 3
  %s296 = smov 192
  %v297 = vld [vmem:[%s295] ss:$16 sm:%s296]
  %vm298 = vcmask 1047558
  %v299 = vsel %vm298, %v297, %v294
  %300 = vrot.lane.b32.xlu0 %v299, 24
  %v301 = vpop.permute.xlu0 %300
  %vm302 = vcmask 261312
  %303 = vst.msk [vmem:[%s1] sm:$0xff] %vm302, %v301
  %s304 = scalar_lea.vmem %s0, 2
  %s305 = smov 3
  %v306 = vld [vmem:[%s304] ss:$16 sm:%s305]
  %s307 = scalar_lea.vmem %s0, 2
  %s308 = smov 12
  %v309 = vld [vmem:[%s307] ss:$16 sm:%s308]
  %vm310 = vcmask 1043458
  %v311 = vsel %vm310, %v309, %v306
  %s312 = scalar_lea.vmem %s0, 2
  %s313 = smov 48
  %v314 = vld [vmem:[%s312] ss:$16 sm:%s313]
  %vm315 = vcmask 1045508
  %v316 = vsel %vm315, %v314, %v311
  %s317 = scalar_lea.vmem %s0, 2
  %s318 = smov 192
  %v319 = vld [vmem:[%s317] ss:$16 sm:%s318]
  %vm320 = vcmask 1047558
  %v321 = vsel %vm320, %v319, %v316
  %322 = vrot.lane.b32.xlu0 %v321, 16
  %v323 = vpop.permute.xlu0 %322
  %vm324 = vcmask 195712
  %325 = vst.msk [vmem:[%s1] sm:$0xff] %vm324, %v323
  %s326 = scalar_lea.vmem %s0, 1
  %s327 = smov 3
  %v328 = vld [vmem:[%s326] ss:$16 sm:%s327]
  %s329 = scalar_lea.vmem %s0, 1
  %s330 = smov 12
  %v331 = vld [vmem:[%s329] ss:$16 sm:%s330]
  %vm332 = vcmask 1043458
  %v333 = vsel %vm332, %v331, %v328
  %s334 = scalar_lea.vmem %s0, 1
  %s335 = smov 48
  %v336 = vld [vmem:[%s334] ss:$16 sm:%s335]
  %vm337 = vcmask 1045508
  %v338 = vsel %vm337, %v336, %v333
  %s339 = scalar_lea.vmem %s0, 1
  %s340 = smov 192
  %v341 = vld [vmem:[%s339] ss:$16 sm:%s340]
  %vm342 = vcmask 1047558
  %v343 = vsel %vm342, %v341, %v338
  %344 = vrot.lane.b32.xlu0 %v343, 8
  %v345 = vpop.permute.xlu0 %344
  %vm346 = vcmask 130112
  %347 = vst.msk [vmem:[%s1] sm:$0xff] %vm346, %v345

// kernel: inconv_forward.1
$region0: #{inconv_forward.1}
  #allocation0 [shape = 'u32[]', space=smem, size = 0x4, offset = 0x4, fixed_abs, tag = 'smem constant byte address 0x4 - core index']
  #allocation1 [shape = 'u32[144,128]{1,0:T(1,128)}', space=vmem, size = 0x12000, scoped, tag = 'internal scratch']
  #allocation2 [shape = 'f32[18,128]{1,0:T(8,128)}', space=vmem, size = 0x3000, scoped, tag = 'scratch operand']
  %s0 = inlined_call_operand.vmem [shape: f32[2,18,64], index: 0, kind: input, shape index: {}]
  %s1 = inlined_call_operand.vmem [shape: f32[3,64,128], index: 1, kind: input, shape index: {}]
  %s2 = inlined_call_operand.vmem [shape: f32[3,128,128], index: 2, kind: input, shape index: {}]
  %s3 = inlined_call_operand.vmem [shape: f32[128,8], index: 3, kind: input, shape index: {}]
  %s4 = inlined_call_operand.vmem [shape: f32[8,128], index: 4, kind: input, shape index: {}]
  %s5 = inlined_call_operand.vmem [shape: f32[4,8], index: 5, kind: input, shape index: {}]
  %s6 = inlined_call_operand.vmem [shape: f32[2,16,128], index: 6, kind: output, shape index: {}]
  %s7 = sld [smem:[#allocation0]]
  $region57: #{inconv_forward.1} parent=0
    _
  %s9 = ssub.s32 1, %s7
  %s10 = scalar_select 0, %s9, %s7
  loop: start=0, step=1, limit=4
  $region2: #{inconv_forward.1} parent=0 // loop_pre_header
    _
  $region3: #{inconv_forward.1} parent=0 // loop_header
    %s12 = sphi 0, %s16
    %p13 = scmp.ge.s32.totalorder %s12, 4
    %s22 = sphi 0, %s24
    %s25 = sphi 0, %s22
    %s26 = sphi 0, %s25
    %s42 = sphi 0, %s26
    %s46 = sphi 0, %s46
    %s48 = sphi 0, %s46
    %s49 = sphi 0, %s48
    %s63 = sphi 0, %s49
    %s67 = sphi 0, %s67
    %s69 = sphi 0, %s67
    %s70 = sphi 0, %s69
    %s84 = sphi 0, %s70
    %s88 = sphi 0, %s88
    %s90 = sphi 0, %s88
    %s91 = sphi 0, %s90
    %s105 = sphi 0, %s91
    %s109 = sphi 0, %s109
    %s111 = sphi 0, %s109
    %s112 = sphi 0, %s111
    %s126 = sphi 0, %s112
    %s130 = sphi 0, %s130
    %s132 = sphi 0, %s130
    %s133 = sphi 0, %s132
    %s147 = sphi 0, %s133
    %s153 = sphi 0, %s155
    %s156 = sphi 0, %s153
    %s157 = sphi 0, %s156
    %s173 = sphi 0, %s157
  $region4: #{inconv_forward.1} parent=0 // loop_header_branch
    %15 = sbr.rel (%p13) target = $region8
  $region5: #{inconv_forward.1} parent=0 // loop_body
    %s17 = ssub.s32 %s12, 1
    %s18 = ssub.s32 %s12, 2
    %s19 = sadd.s32 %s12, 1
    %s20 = ssub.s32 %s12, %s19
    %p21 = scmp.eq.s32.totalorder %s20, 0
    %s23 = sadd.s32 %s22, 1
    %s24 = scalar_select %p21, %s22, %s23
    %p27 = pneg %p21
    %p28 = scmp.eq.s32.totalorder %s12, 1
    %p29 = por %p27, %p28
    %p30 = scmp.ne.s32.totalorder %s22, %s25
    %p31 = scmp.eq.s32.totalorder %s12, 0
    %p32 = por %p30, %p31
    %p33 = scmp.ne.s32.totalorder %s22, %s25
    %p34 = scmp.eq.s32.totalorder %s17, 1
    %p35 = por %p33, %p34
    %p36 = scmp.ne.s32.totalorder %s25, %s26
    %p37 = scmp.eq.s32.totalorder %s17, 0
    %p38 = por %p36, %p37
    %p39 = scmp.ne.s32.totalorder %s25, %s26
    %p40 = scmp.eq.s32.totalorder %s18, 1
    %p41 = por %p39, %p40
    %p43 = scmp.ne.s32.totalorder %s26, %s42
    %p44 = scmp.eq.s32.totalorder %s18, 0
    %p45 = por %p43, %p44
    %s47 = sadd.s32 %s46, 1
    %p50 = scmp.eq.s32.totalorder %s12, 1
    %p51 = scmp.ne.s32.totalorder %s46, %s48
    %p52 = scmp.eq.s32.totalorder %s12, 0
    %p53 = por %p51, %p52
    %p54 = scmp.ne.s32.totalorder %s46, %s48
    %p55 = scmp.eq.s32.totalorder %s17, 1
    %p56 = por %p54, %p55
    %p57 = scmp.ne.s32.totalorder %s48, %s49
    %p58 = scmp.eq.s32.totalorder %s17, 0
    %p59 = por %p57, %p58
    %p60 = scmp.ne.s32.totalorder %s48, %s49
    %p61 = scmp.eq.s32.totalorder %s18, 1
    %p62 = por %p60, %p61
    %p64 = scmp.ne.s32.totalorder %s49, %s63
    %p65 = scmp.eq.s32.totalorder %s18, 0
    %p66 = por %p64, %p65
    %s68 = sadd.s32 %s67, 1
    %p71 = scmp.eq.s32.totalorder %s12, 1
    %p72 = scmp.ne.s32.totalorder %s67, %s69
    %p73 = scmp.eq.s32.totalorder %s12, 0
    %p74 = por %p72, %p73
    %p75 = scmp.ne.s32.totalorder %s67, %s69
    %p76 = scmp.eq.s32.totalorder %s17, 1
    %p77 = por %p75, %p76
    %p78 = scmp.ne.s32.totalorder %s69, %s70
    %p79 = scmp.eq.s32.totalorder %s17, 0
    %p80 = por %p78, %p79
    %p81 = scmp.ne.s32.totalorder %s69, %s70
    %p82 = scmp.eq.s32.totalorder %s18, 1
    %p83 = por %p81, %p82
    %p85 = scmp.ne.s32.totalorder %s70, %s84
    %p86 = scmp.eq.s32.totalorder %s18, 0
    %p87 = por %p85, %p86
    %s89 = sadd.s32 %s88, 1
    %p92 = scmp.eq.s32.totalorder %s12, 1
    %p93 = scmp.ne.s32.totalorder %s88, %s90
    %p94 = scmp.eq.s32.totalorder %s12, 0
    %p95 = por %p93, %p94
    %p96 = scmp.ne.s32.totalorder %s88, %s90
    %p97 = scmp.eq.s32.totalorder %s17, 1
    %p98 = por %p96, %p97
    %p99 = scmp.ne.s32.totalorder %s90, %s91
    %p100 = scmp.eq.s32.totalorder %s17, 0
    %p101 = por %p99, %p100
    %p102 = scmp.ne.s32.totalorder %s90, %s91
    %p103 = scmp.eq.s32.totalorder %s18, 1
    %p104 = por %p102, %p103
    %p106 = scmp.ne.s32.totalorder %s91, %s105
    %p107 = scmp.eq.s32.totalorder %s18, 0
    %p108 = por %p106, %p107
    %s110 = sadd.s32 %s109, 1
    %p113 = scmp.eq.s32.totalorder %s12, 1
    %p114 = scmp.ne.s32.totalorder %s109, %s111
    %p115 = scmp.eq.s32.totalorder %s12, 0
    %p116 = por %p114, %p115
    %p117 = scmp.ne.s32.totalorder %s109, %s111
    %p118 = scmp.eq.s32.totalorder %s17, 1
    %p119 = por %p117, %p118
    %p120 = scmp.ne.s32.totalorder %s111, %s112
    %p121 = scmp.eq.s32.totalorder %s17, 0
    %p122 = por %p120, %p121
    %p123 = scmp.ne.s32.totalorder %s111, %s112
    %p124 = scmp.eq.s32.totalorder %s18, 1
    %p125 = por %p123, %p124
    %p127 = scmp.ne.s32.totalorder %s112, %s126
    %p128 = scmp.eq.s32.totalorder %s18, 0
    %p129 = por %p127, %p128
    %s131 = sadd.s32 %s130, 1
    %p134 = scmp.eq.s32.totalorder %s12, 1
    %p135 = scmp.ne.s32.totalorder %s130, %s132
    %p136 = scmp.eq.s32.totalorder %s12, 0
    %p137 = por %p135, %p136
    %p138 = scmp.ne.s32.totalorder %s130, %s132
    %p139 = scmp.eq.s32.totalorder %s17, 1
    %p140 = por %p138, %p139
    %p141 = scmp.ne.s32.totalorder %s132, %s133
    %p142 = scmp.eq.s32.totalorder %s17, 0
    %p143 = por %p141, %p142
    %p144 = scmp.ne.s32.totalorder %s132, %s133
    %p145 = scmp.eq.s32.totalorder %s18, 1
    %p146 = por %p144, %p145
    %p148 = scmp.ne.s32.totalorder %s133, %s147
    %p149 = scmp.eq.s32.totalorder %s18, 0
    %p150 = por %p148, %p149
    %s151 = ssub.s32 %s12, %s19
    %p152 = scmp.eq.s32.totalorder %s151, 0
    %s154 = sadd.s32 %s153, 1
    %s155 = scalar_select %p152, %s153, %s154
    %p158 = pneg %p152
    %p159 = scmp.eq.s32.totalorder %s12, 1
    %p160 = por %p158, %p159
    %p161 = scmp.ne.s32.totalorder %s153, %s156
    %p162 = scmp.eq.s32.totalorder %s12, 0
    %p163 = por %p161, %p162
    %p164 = scmp.ne.s32.totalorder %s153, %s156
    %p165 = scmp.eq.s32.totalorder %s17, 1
    %p166 = por %p164, %p165
    %p167 = scmp.ne.s32.totalorder %s156, %s157
    %p168 = scmp.eq.s32.totalorder %s17, 0
    %p169 = por %p167, %p168
    %p170 = scmp.ne.s32.totalorder %s156, %s157
    %p171 = scmp.eq.s32.totalorder %s18, 1
    %p172 = por %p170, %p171
    %p174 = scmp.ne.s32.totalorder %s157, %s173
    %p175 = scmp.eq.s32.totalorder %s18, 0
    %p176 = por %p174, %p175
    %p177 = scmp.le.s32.totalorder 1, %s12
    %p178 = scmp.lt.s32.totalorder %s12, 3
    %p179 = pnand %p177, %p178
    %p180 = pneg %p179
    // Predicated region
    $region9: #{inconv_forward.1} parent=5 // pred_check
      _
    $region10: #{inconv_forward.1} parent=5 // pred_check_branch
      %182 = sbr.rel (%p179) target = $region12
    $region11: #{inconv_forward.1} parent=5 // pred_region
      %s183 = ssub.s32 %s12, 1
      // Predicated region
      $region13: #{inconv_forward.1} parent=11 // pred_check
        %p184 = pneg %p59
      $region14: #{inconv_forward.1} parent=11 // pred_check_branch
        %186 = sbr.rel (%p184) target = $region16
      $region15: #{inconv_forward.1} parent=11 // pred_region
        _
      $region16: #{inconv_forward.1} parent=11 // pred_fallthru
        _
      // Predicated region
      $region17: #{inconv_forward.1} parent=11 // pred_check
        %p187 = pneg %p80
      $region18: #{inconv_forward.1} parent=11 // pred_check_branch
        %189 = sbr.rel (%p187) target = $region20
      $region19: #{inconv_forward.1} parent=11 // pred_region
        _
      $region20: #{inconv_forward.1} parent=11 // pred_fallthru
        _
      // Predicated region
      $region21: #{inconv_forward.1} parent=11 // pred_check
        %p190 = pneg %p101
      $region22: #{inconv_forward.1} parent=11 // pred_check_branch
        %192 = sbr.rel (%p190) target = $region24
      $region23: #{inconv_forward.1} parent=11 // pred_region
        _
      $region24: #{inconv_forward.1} parent=11 // pred_fallthru
        _
      // Predicated region
      $region25: #{inconv_forward.1} parent=11 // pred_check
        %p193 = pneg %p122
      $region26: #{inconv_forward.1} parent=11 // pred_check_branch
        %195 = sbr.rel (%p193) target = $region28
      $region27: #{inconv_forward.1} parent=11 // pred_region
        _
      $region28: #{inconv_forward.1} parent=11 // pred_fallthru
        _
      // Predicated region
      $region29: #{inconv_forward.1} parent=11 // pred_check
        %p196 = pneg %p143
      $region30: #{inconv_forward.1} parent=11 // pred_check_branch
        %198 = sbr.rel (%p196) target = $region32
      $region31: #{inconv_forward.1} parent=11 // pred_region
        _
      $region32: #{inconv_forward.1} parent=11 // pred_fallthru
        _
    $region12: #{inconv_forward.1} parent=5 // pred_fallthru
      _
    %p199 = scmp.lt.s32.totalorder %s12, 2
    // Predicated region
    $region33: #{inconv_forward.1} parent=5 // pred_check
      %p200 = pneg %p199
    $region34: #{inconv_forward.1} parent=5 // pred_check_branch
      %202 = sbr.rel (%p200) target = $region36
    $region35: #{inconv_forward.1} parent=5 // pred_region
      // Predicated region
      $region37: #{inconv_forward.1} parent=35 // pred_check
        %p203 = pneg %p32
      $region38: #{inconv_forward.1} parent=35 // pred_check_branch
        %205 = sbr.rel (%p203) target = $region40
      $region39: #{inconv_forward.1} parent=35 // pred_region
        %p206 = scmp.lt.s32.totalorder %s12, 1
        %s207 = scalar_select %p206, %s12, 1
        %s208 = smul.addr %s207, 3
        %s209 = smul.addr %s208, 8
        %s210 = scalar_lea.vmem %s0, %s209
      $region40: #{inconv_forward.1} parent=35 // pred_fallthru
        _
    $region36: #{inconv_forward.1} parent=5 // pred_fallthru
      _
    %p211 = scmp.le.s32.totalorder 1, %s12
    %p212 = scmp.lt.s32.totalorder %s12, 3
    %p213 = pnand %p211, %p212
    %p214 = pneg %p213
    // Predicated region
    $region41: #{inconv_forward.1} parent=5 // pred_check
      _
    $region42: #{inconv_forward.1} parent=5 // pred_check_branch
      %216 = sbr.rel (%p213) target = $region44
    $region43: #{inconv_forward.1} parent=5 // pred_region
      %s217 = ssub.s32 %s12, 1
      %p218 = scmp.lt.s32.totalorder %s17, 1
      %s219 = scalar_select %p218, %s17, 1
      %s220 = smul.addr %s219, 3
      %s221 = smul.addr %s220, 8
      %s222 = scalar_lea.vmem %s0, %s221
      %p223 = pneg %p38
      %p224 = pneg %p35
      %p225 = pneg %p59
      %p226 = pneg %p56
      %p227 = pneg %p80
      %p228 = pneg %p77
      %p229 = pneg %p101
      %p230 = pneg %p98
      %p231 = pneg %p122
      %p232 = pneg %p119
      %p233 = pneg %p143
      %p234 = pneg %p140
      %p235 = pneg %p169
      %p236 = pneg %p166
      %p237 = scmp.lt.s32.totalorder %s17, 1
      %s238 = scalar_select %p237, %s17, 1
      %s239 = smul.addr %s238, 2
      %s240 = smul.addr %s239, 8
      %s241 = scalar_lea.vmem %s6, %s240
      %p242 = scmp.lt.s32.totalorder %s17, 1
      %s243 = scalar_select %p242, %s17, 1
      %s244 = smul.addr %s243, 3
      %s245 = smul.addr %s244, 8
      %s246 = scalar_lea.vmem %s0, %s245
      %p247 = scmp.lt.s32.totalorder %s17, 1
      %s248 = scalar_select %p247, %s17, 1
      %s249 = smul.addr %s248, 2
      %s250 = smul.addr %s249, 8
      %s251 = scalar_lea.vmem %s6, %s250
      %252 = vst [vmem:[#allocation2] sm:$0x1] 0.0
      %253 = vst [vmem:[#allocation2 + $0x11] sm:$0x1] 0.0
      %v254 = vld [vmem:[%s246] sm:$0xff]
      %v255 = vld [vmem:[%s246 + $0x8] sm:$0xff]
      %v256 = vld [vmem:[%s1] sm:$0xff]
      %v257 = vld [vmem:[%s1 + $0x8] sm:$0xff]
      %v258 = vld [vmem:[%s1 + $0x10] sm:$0xff]
      %v259 = vld [vmem:[%s1 + $0x18] sm:$0xff]
      %v260 = vld [vmem:[%s1 + $0x20] sm:$0xff]
      %v261 = vld [vmem:[%s1 + $0x28] sm:$0xff]
      %v262 = vld [vmem:[%s1 + $0x30] sm:$0xff]
      %v263 = vld [vmem:[%s1 + $0x38] sm:$0xff]
      %v264 = vld [vmem:[%s246 + $0x1] sm:$0xff]
      %v265 = vld [vmem:[%s246 + $0x9] sm:$0xff]
      %s266 = scalar_lea.vmem %s1, 64
      %v267 = vld [vmem:[%s266] sm:$0xff]
      %v268 = vld [vmem:[%s266 + $0x8] sm:$0xff]
      %v269 = vld [vmem:[%s266 + $0x10] sm:$0xff]
      %v270 = vld [vmem:[%s266 + $0x18] sm:$0xff]
      %v271 = vld [vmem:[%s266 + $0x20] sm:$0xff]
      %v272 = vld [vmem:[%s266 + $0x28] sm:$0xff]
      %v273 = vld [vmem:[%s266 + $0x30] sm:$0xff]
      %v274 = vld [vmem:[%s266 + $0x38] sm:$0xff]
      %vm275 = vcmask 523264
      %v277 = vsel %vm275, %v264, 0
      %v280 = vsel %vm275, %v265, 0
      %282 = vmatprep.subr.mxu0 0.0
      %283 = vmatpush1.msra.mxu0 %v267
      %284 = vmatprep.subr.mxu0 0.0
      %285 = vmatpush1.msra.mxu0 %v268
      %286 = vmatprep.subr.mxu0 0.0
      %287 = vmatpush1.msra.mxu0 %v269
      %288 = vmatprep.subr.mxu0 0.0
      %289 = vmatpush1.msra.mxu0 %v270
      %290 = vmatprep.subr.mxu0 0.0
      %291 = vmatpush1.msra.mxu0 %v271
      %292 = vmatprep.subr.mxu0 0.0
      %293 = vmatpush1.msra.mxu0 %v272
      %294 = vmatprep.subr.mxu0 0.0
      %295 = vmatpush1.msra.mxu0 %v273
      %296 = vmatprep.subr.mxu0 0.0
      %297 = vmatpush1.msra.mxu0 %v274
      %298 = vmatprep.subr.mxu0 0.0
      %299 = vmatpush1.msra.mxu0 0.0
      %300 = vmatprep.subr.mxu0 0.0
      %301 = vmatpush1.msra.mxu0 0.0
      %302 = vmatprep.subr.mxu0 0.0
      %303 = vmatpush1.msra.mxu0 0.0
      %304 = vmatprep.subr.mxu0 0.0
      %305 = vmatpush1.msra.mxu0 0.0
      %306 = vmatprep.subr.mxu0 0.0
      %307 = vmatpush1.msra.mxu0 0.0
      %308 = vmatprep.subr.mxu0 0.0
      %309 = vmatpush1.msra.mxu0 0.0
      %310 = vmatprep.subr.mxu0 0.0
      %311 = vmatpush1.msra.mxu0 0.0
      %312 = vmatprep.subr.mxu0 0.0
      %313 = vmatpush1.msra.mxu0 0.0
      %314 = vmatprep.subr.mxu0 0.0
      %315 = vmatpush1.msra.mxu0 0.0
      %316 = vmatprep.subr.mxu0 0.0
      %317 = vmatpush1.msra.mxu0 0.0
      %318 = vmatprep.subr.mxu0 0.0
      %319 = vmatpush1.msra.mxu0 0.0
      %320 = vmatprep.subr.mxu0 0.0
      %321 = vmatpush1.msra.mxu0 0.0
      %322 = vmatprep.subr.mxu0 0.0
      %323 = vmatpush1.msra.mxu0 0.0
      %324 = vmatprep.subr.mxu0 0.0
      %325 = vmatpush1.msra.mxu0 0.0
      %326 = vmatprep.subr.mxu0 0.0
      %327 = vmatpush1.msra.mxu0 0.0
      %328 = vmatprep.subr.mxu0 0.0
      %329 = vmatpush1.msra.mxu0 0.0
      %330 = vmatprep.subr.mxu0 0.0
      %331 = vmatpush1.msra.mxu0 0.0
      %332 = vmatprep.subr.mxu0 0.0
      %333 = vmatpush1.msra.mxu0 0.0
      %334 = vmatprep.subr.mxu0 0.0
      %335 = vmatpush1.msra.mxu0 0.0
      %336 = vmatprep.subr.mxu0 0.0
      %337 = vmatpush1.msra.mxu0 0.0
      %338 = vmatprep.subr.mxu0 0.0
      %339 = vmatpush1.msra.mxu0 0.0
      %340 = vmatprep.subr.mxu0 0.0
      %341 = vmatpush1.msra.mxu0 0.0
      %342 = vmatprep.subr.mxu0 0.0
      %343 = vmatpush1.msra.mxu0 0.0
      %344 = vmatprep.subr.mxu0 0.0
      %345 = vmatpush1.msra.mxu0 0.0
      %346 = vmatprep.mubr.f32.mxu0 0.0
      %347 = vmatmul.mubr.f32.gmra.mrb[0].mxu0 %v277
      %v348 = vpop.f32.mrb[0].mxu0
      %v349 = vadd.f32 0.0, %v348
      %v350 = vpop.f32.mrb[0].mxu0
      %351 = vmatprep.mubr.f32.mxu0 0.0
      %352 = vmatmul.mubr.f32.gmra.mrb[0].mxu0 %v280
      %v353 = vpop.f32.mrb[0].mxu0
      %v354 = vadd.f32 0.0, %v353
      %v355 = vpop.f32.mrb[0].mxu0
      %356 = vdwg.mxu0
      %v358 = vsel %vm275, %v254, 0
      %v361 = vsel %vm275, %v255, 0
      %363 = vmatprep.subr.mxu0 0.0
      %364 = vmatpush1.msra.mxu0 %v256
      %365 = vmatprep.subr.mxu0 0.0
      %366 = vmatpush1.msra.mxu0 %v257
      %367 = vmatprep.subr.mxu0 0.0
      %368 = vmatpush1.msra.mxu0 %v258
      %369 = vmatprep.subr.mxu0 0.0
      %370 = vmatpush1.msra.mxu0 %v259
      %371 = vmatprep.subr.mxu0 0.0
      %372 = vmatpush1.msra.mxu0 %v260
      %373 = vmatprep.subr.mxu0 0.0
      %374 = vmatpush1.msra.mxu0 %v261
      %375 = vmatprep.subr.mxu0 0.0
      %376 = vmatpush1.msra.mxu0 %v262
      %377 = vmatprep.subr.mxu0 0.0
      %378 = vmatpush1.msra.mxu0 %v263
      %379 = vmatprep.subr.mxu0 0.0
      %380 = vmatpush1.msra.mxu0 0.0
      %381 = vmatprep.subr.mxu0 0.0
      %382 = vmatpush1.msra.mxu0 0.0
      %383 = vmatprep.subr.mxu0 0.0
      %384 = vmatpush1.msra.mxu0 0.0
      %385 = vmatprep.subr.mxu0 0.0
      %386 = vmatpush1.msra.mxu0 0.0
      %387 = vmatprep.subr.mxu0 0.0
      %388 = vmatpush1.msra.mxu0 0.0
      %389 = vmatprep.subr.mxu0 0.0
      %390 = vmatpush1.msra.mxu0 0.0
      %391 = vmatprep.subr.mxu0 0.0
      %392 = vmatpush1.msra.mxu0 0.0
      %393 = vmatprep.subr.mxu0 0.0
      %394 = vmatpush1.msra.mxu0 0.0
      %395 = vmatprep.subr.mxu0 0.0
      %396 = vmatpush1.msra.mxu0 0.0
      %397 = vmatprep.subr.mxu0 0.0
      %398 = vmatpush1.msra.mxu0 0.0
      %399 = vmatprep.subr.mxu0 0.0
      %400 = vmatpush1.msra.mxu0 0.0
      %401 = vmatprep.subr.mxu0 0.0
      %402 = vmatpush1.msra.mxu0 0.0
      %403 = vmatprep.subr.mxu0 0.0
      %404 = vmatpush1.msra.mxu0 0.0
      %405 = vmatprep.subr.mxu0 0.0
      %406 = vmatpush1.msra.mxu0 0.0
      %407 = vmatprep.subr.mxu0 0.0
      %408 = vmatpush1.msra.mxu0 0.0
      %409 = vmatprep.subr.mxu0 0.0
      %410 = vmatpush1.msra.mxu0 0.0
      %411 = vmatprep.subr.mxu0 0.0
      %412 = vmatpush1.msra.mxu0 0.0
      %413 = vmatprep.subr.mxu0 0.0
      %414 = vmatpush1.msra.mxu0 0.0
      %415 = vmatprep.subr.mxu0 0.0
      %416 = vmatpush1.msra.mxu0 0.0
      %417 = vmatprep.subr.mxu0 0.0
      %418 = vmatpush1.msra.mxu0 0.0
      %419 = vmatprep.subr.mxu0 0.0
      %420 = vmatpush1.msra.mxu0 0.0
      %421 = vmatprep.subr.mxu0 0.0
      %422 = vmatpush1.msra.mxu0 0.0
      %423 = vmatprep.subr.mxu0 0.0
      %424 = vmatpush1.msra.mxu0 0.0
      %425 = vmatprep.subr.mxu0 0.0
      %426 = vmatpush1.msra.mxu0 0.0
      %427 = vmatprep.mubr.f32.mxu0 0.0
      %428 = vmatmul.mubr.f32.gmra.mrb[0].mxu0 %v358
      %v429 = vpop.f32.mrb[0].mxu0
      %v430 = vadd.f32 %v349, %v429
      %v431 = vpop.f32.mrb[0].mxu0
      %432 = vmatprep.mubr.f32.mxu0 0.0
      %433 = vmatmul.mubr.f32.gmra.mrb[0].mxu0 %v361
      %v434 = vpop.f32.mrb[0].mxu0
      %v435 = vadd.f32 %v354, %v434
      %v436 = vpop.f32.mrb[0].mxu0
      %437 = vdwg.mxu0
      %v438 = vld [vmem:[%s246 + $0x2] sm:$0xff]
      %v439 = vld [vmem:[%s246 + $0xa] sm:$0xff]
      %s440 = scalar_lea.vmem %s1, 128
      %v441 = vld [vmem:[%s440] sm:$0xff]
      %v442 = vld [vmem:[%s440 + $0x8] sm:$0xff]
      %v443 = vld [vmem:[%s440 + $0x10] sm:$0xff]
      %v444 = vld [vmem:[%s440 + $0x18] sm:$0xff]
      %v445 = vld [vmem:[%s440 + $0x20] sm:$0xff]
      %v446 = vld [vmem:[%s440 + $0x28] sm:$0xff]
      %v447 = vld [vmem:[%s440 + $0x30] sm:$0xff]
      %v448 = vld [vmem:[%s440 + $0x38] sm:$0xff]
      %v450 = vsel %vm275, %v438, 0
      %v453 = vsel %vm275, %v439, 0
      %455 = vmatprep.subr.mxu0 0.0
      %456 = vmatpush1.msra.mxu0 %v441
      %457 = vmatprep.subr.mxu0 0.0
      %458 = vmatpush1.msra.mxu0 %v442
      %459 = vmatprep.subr.mxu0 0.0
      %460 = vmatpush1.msra.mxu0 %v443
      %461 = vmatprep.subr.mxu0 0.0
      %462 = vmatpush1.msra.mxu0 %v444
      %463 = vmatprep.subr.mxu0 0.0
      %464 = vmatpush1.msra.mxu0 %v445
      %465 = vmatprep.subr.mxu0 0.0
      %466 = vmatpush1.msra.mxu0 %v446
      %467 = vmatprep.subr.mxu0 0.0
      %468 = vmatpush1.msra.mxu0 %v447
      %469 = vmatprep.subr.mxu0 0.0
      %470 = vmatpush1.msra.mxu0 %v448
      %471 = vmatprep.subr.mxu0 0.0
      %472 = vmatpush1.msra.mxu0 0.0
      %473 = vmatprep.subr.mxu0 0.0
      %474 = vmatpush1.msra.mxu0 0.0
      %475 = vmatprep.subr.mxu0 0.0
      %476 = vmatpush1.msra.mxu0 0.0
      %477 = vmatprep.subr.mxu0 0.0
      %478 = vmatpush1.msra.mxu0 0.0
      %479 = vmatprep.subr.mxu0 0.0
      %480 = vmatpush1.msra.mxu0 0.0
      %481 = vmatprep.subr.mxu0 0.0
      %482 = vmatpush1.msra.mxu0 0.0
      %483 = vmatprep.subr.mxu0 0.0
      %484 = vmatpush1.msra.mxu0 0.0
      %485 = vmatprep.subr.mxu0 0.0
      %486 = vmatpush1.msra.mxu0 0.0
      %487 = vmatprep.subr.mxu0 0.0
      %488 = vmatpush1.msra.mxu0 0.0
      %489 = vmatprep.subr.mxu0 0.0
      %490 = vmatpush1.msra.mxu0 0.0
      %491 = vmatprep.subr.mxu0 0.0
      %492 = vmatpush1.msra.mxu0 0.0
      %493 = vmatprep.subr.mxu0 0.0
      %494 = vmatpush1.msra.mxu0 0.0
      %495 = vmatprep.subr.mxu0 0.0
      %496 = vmatpush1.msra.mxu0 0.0
      %497 = vmatprep.subr.mxu0 0.0
      %498 = vmatpush1.msra.mxu0 0.0
      %499 = vmatprep.subr.mxu0 0.0
      %500 = vmatpush1.msra.mxu0 0.0
      %501 = vmatprep.subr.mxu0 0.0
      %502 = vmatpush1.msra.mxu0 0.0
      %503 = vmatprep.subr.mxu0 0.0
      %504 = vmatpush1.msra.mxu0 0.0
      %505 = vmatprep.subr.mxu0 0.0
      %506 = vmatpush1.msra.mxu0 0.0
      %507 = vmatprep.subr.mxu0 0.0
      %508 = vmatpush1.msra.mxu0 0.0
      %509 = vmatprep.subr.mxu0 0.0
      %510 = vmatpush1.msra.mxu0 0.0
      %511 = vmatprep.subr.mxu0 0.0
      %512 = vmatpush1.msra.mxu0 0.0
      %513 = vmatprep.subr.mxu0 0.0
      %514 = vmatpush1.msra.mxu0 0.0
      %515 = vmatprep.subr.mxu0 0.0
      %516 = vmatpush1.msra.mxu0 0.0
      %517 = vmatprep.subr.mxu0 0.0
      %518 = vmatpush1.msra.mxu0 0.0
      %519 = vmatprep.mubr.f32.mxu0 0.0
      %520 = vmatmul.mubr.f32.gmra.mrb[0].mxu0 %v450
      %v521 = vpop.f32.mrb[0].mxu0
      %v522 = vadd.f32 0.0, %v521
      %v523 = vpop.f32.mrb[0].mxu0
      %524 = vmatprep.mubr.f32.mxu0 0.0
      %525 = vmatmul.mubr.f32.gmra.mrb[0].mxu0 %v453
      %v526 = vpop.f32.mrb[0].mxu0
      %v527 = vadd.f32 0.0, %v526
      %v528 = vpop.f32.mrb[0].mxu0
      %529 = vdwg.mxu0
      %v530 = vadd.f32 %v430, %v522
      %v531 = vadd.f32 %v435, %v527
      %v532 = vld [vmem:[%s5] sm:$0x1]
      %v533 = vld [vmem:[%s5 + $0x1] sm:$0x1]
      %v534 = vadd.f32 %v530, %v531
      %v535 = vrot.slane %v534, 4
      %v536 = vadd.f32 %v534, %v535
      %v537 = vrot.slane %v536, 2
      %v538 = vadd.f32 %v536, %v537
      %v539 = vrot.slane %v538, 1
      %v540 = vadd.f32 %v538, %v539
      %v541 = vmul.f32 %v530, %v530
      %v542 = vmul.f32 %v531, %v531
      %v543 = vadd.f32 %v541, %v542
      %v544 = vrot.slane %v543, 4
      %v545 = vadd.f32 %v543, %v544
      %v546 = vrot.slane %v545, 2
      %v547 = vadd.f32 %v545, %v546
      %v548 = vrot.slane %v547, 1
      %v549 = vadd.f32 %v547, %v548
      %vm550 = vcmask 1040384
      %v551 = vsel %vm550, %v540, %v549
      %v552 = vld [vmem:[%s3] sm:$0xff]
      %v553 = vld [vmem:[%s3 + $0x8] sm:$0xff]
      %v554 = vld [vmem:[%s3 + $0x10] sm:$0xff]
      %v555 = vld [vmem:[%s3 + $0x18] sm:$0xff]
      %v556 = vld [vmem:[%s3 + $0x20] sm:$0xff]
      %v557 = vld [vmem:[%s3 + $0x28] sm:$0xff]
      %v558 = vld [vmem:[%s3 + $0x30] sm:$0xff]
      %v559 = vld [vmem:[%s3 + $0x38] sm:$0xff]
      %v560 = vld [vmem:[%s3 + $0x40] sm:$0xff]
      %v561 = vld [vmem:[%s3 + $0x48] sm:$0xff]
      %v562 = vld [vmem:[%s3 + $0x50] sm:$0xff]
      %v563 = vld [vmem:[%s3 + $0x58] sm:$0xff]
      %v564 = vld [vmem:[%s3 + $0x60] sm:$0xff]
      %v565 = vld [vmem:[%s3 + $0x68] sm:$0xff]
      %v566 = vld [vmem:[%s3 + $0x70] sm:$0xff]
      %v567 = vld [vmem:[%s3 + $0x78] sm:$0xff]
      %568 = vmatprep.subr.mxu0 0.0
      %569 = vmatpush1.msra.mxu0 %v552
      %570 = vmatprep.subr.mxu0 0.0
      %571 = vmatpush1.msra.mxu0 %v553
      %572 = vmatprep.subr.mxu0 0.0
      %573 = vmatpush1.msra.mxu0 %v554
      %574 = vmatprep.subr.mxu0 0.0
      %575 = vmatpush1.msra.mxu0 %v555
      %576 = vmatprep.subr.mxu0 0.0
      %577 = vmatpush1.msra.mxu0 %v556
      %578 = vmatprep.subr.mxu0 0.0
      %579 = vmatpush1.msra.mxu0 %v557
      %580 = vmatprep.subr.mxu0 0.0
      %581 = vmatpush1.msra.mxu0 %v558
      %582 = vmatprep.subr.mxu0 0.0
      %583 = vmatpush1.msra.mxu0 %v559
      %584 = vmatprep.subr.mxu0 0.0
      %585 = vmatpush1.msra.mxu0 %v560
      %586 = vmatprep.subr.mxu0 0.0
      %587 = vmatpush1.msra.mxu0 %v561
      %588 = vmatprep.subr.mxu0 0.0
      %589 = vmatpush1.msra.mxu0 %v562
      %590 = vmatprep.subr.mxu0 0.0
      %591 = vmatpush1.msra.mxu0 %v563
      %592 = vmatprep.subr.mxu0 0.0
      %593 = vmatpush1.msra.mxu0 %v564
      %594 = vmatprep.subr.mxu0 0.0
      %595 = vmatpush1.msra.mxu0 %v565
      %596 = vmatprep.subr.mxu0 0.0
      %597 = vmatpush1.msra.mxu0 %v566
      %598 = vmatprep.subr.mxu0 0.0
      %599 = vmatpush1.msra.mxu0 %v567
      %600 = vmatprep.subr.mxu0 0.0
      %601 = vmatpush1.msra.mxu0 0.0
      %602 = vmatprep.subr.mxu0 0.0
      %603 = vmatpush1.msra.mxu0 0.0
      %604 = vmatprep.subr.mxu0 0.0
      %605 = vmatpush1.msra.mxu0 0.0
      %606 = vmatprep.subr.mxu0 0.0
      %607 = vmatpush1.msra.mxu0 0.0
      %608 = vmatprep.subr.mxu0 0.0
      %609 = vmatpush1.msra.mxu0 0.0
      %610 = vmatprep.subr.mxu0 0.0
      %611 = vmatpush1.msra.mxu0 0.0
      %612 = vmatprep.subr.mxu0 0.0
      %613 = vmatpush1.msra.mxu0 0.0
      %614 = vmatprep.subr.mxu0 0.0
      %615 = vmatpush1.msra.mxu0 0.0
      %616 = vmatprep.subr.mxu0 0.0
      %617 = vmatpush1.msra.mxu0 0.0
      %618 = vmatprep.subr.mxu0 0.0
      %619 = vmatpush1.msra.mxu0 0.0
      %620 = vmatprep.subr.mxu0 0.0
      %621 = vmatpush1.msra.mxu0 0.0
      %622 = vmatprep.subr.mxu0 0.0
      %623 = vmatpush1.msra.mxu0 0.0
      %624 = vmatprep.subr.mxu0 0.0
      %625 = vmatpush1.msra.mxu0 0.0
      %626 = vmatprep.subr.mxu0 0.0
      %627 = vmatpush1.msra.mxu0 0.0
      %628 = vmatprep.subr.mxu0 0.0
      %629 = vmatpush1.msra.mxu0 0.0
      %630 = vmatprep.subr.mxu0 0.0
      %631 = vmatpush1.msra.mxu0 0.0
      %632 = vmatprep.mubr.f32.mxu0 0.0
      %633 = vmatmul.mubr.f32.gmra.mrb[0].mxu0 %v551
      %v634 = vpop.f32.mrb[0].mxu0
      %v635 = vadd.f32 0.0, %v634
      %v636 = vpop.f32.mrb[0].mxu0
      %637 = vdwg.mxu0
      %v638 = vmul.f32 %v635, 0.00390625
      %v639 = vmul.f32 %v638, %v638
      %v641 = vrot.slane %v639, 7
      %v643 = vsub.f32 %v638, %v641
      %v644 = vadd.f32 %v643, 1e-05
      %v645 = vrsqrt.pop %v644
      %v647 = vrot.slane %v645, 1
      %v649 = vmul.f32 %v532, %v647
      %v650 = vmul.f32 %v638, %v649
      %v651 = vsub.f32 %v533, %v650
      %v653 = vrot.slane %v651, 7
      %v655 = vsel %vm550, %v649, %v653
      %v656 = vld [vmem:[%s4] sm:$0xff]
      %vm657 = vcmask 64512
      %v659 = vsel %vm657, %v655, 0
      %661 = vmatprep.subr.mxu0 0.0
      %662 = vmatpush1.msra.mxu0 %v656
      %663 = vmatprep.subr.mxu0 0.0
      %664 = vmatpush1.msra.mxu0 0.0
      %665 = vmatprep.subr.mxu0 0.0
      %666 = vmatpush1.msra.mxu0 0.0
      %667 = vmatprep.subr.mxu0 0.0
      %668 = vmatpush1.msra.mxu0 0.0
      %669 = vmatprep.subr.mxu0 0.0
      %670 = vmatpush1.msra.mxu0 0.0
      %671 = vmatprep.subr.mxu0 0.0
      %672 = vmatpush1.msra.mxu0 0.0
      %673 = vmatprep.subr.mxu0 0.0
      %674 = vmatpush1.msra.mxu0 0.0
      %675 = vmatprep.subr.mxu0 0.0
      %676 = vmatpush1.msra.mxu0 0.0
      %677 = vmatprep.subr.mxu0 0.0
      %678 = vmatpush1.msra.mxu0 0.0
      %679 = vmatprep.subr.mxu0 0.0
      %680 = vmatpush1.msra.mxu0 0.0
      %681 = vmatprep.subr.mxu0 0.0
      %682 = vmatpush1.msra.mxu0 0.0
      %683 = vmatprep.subr.mxu0 0.0
      %684 = vmatpush1.msra.mxu0 0.0
      %685 = vmatprep.subr.mxu0 0.0
      %686 = vmatpush1.msra.mxu0 0.0
      %687 = vmatprep.subr.mxu0 0.0
      %688 = vmatpush1.msra.mxu0 0.0
      %689 = vmatprep.subr.mxu0 0.0
      %690 = vmatpush1.msra.mxu0 0.0
      %691 = vmatprep.subr.mxu0 0.0
      %692 = vmatpush1.msra.mxu0 0.0
      %693 = vmatprep.subr.mxu0 0.0
      %694 = vmatpush1.msra.mxu0 0.0
      %695 = vmatprep.subr.mxu0 0.0
      %696 = vmatpush1.msra.mxu0 0.0
      %697 = vmatprep.subr.mxu0 0.0
      %698 = vmatpush1.msra.mxu0 0.0
      %699 = vmatprep.subr.mxu0 0.0
      %700 = vmatpush1.msra.mxu0 0.0
      %701 = vmatprep.subr.mxu0 0.0
      %702 = vmatpush1.msra.mxu0 0.0
      %703 = vmatprep.subr.mxu0 0.0
      %704 = vmatpush1.msra.mxu0 0.0
      %705 = vmatprep.subr.mxu0 0.0
      %706 = vmatpush1.msra.mxu0 0.0
      %707 = vmatprep.subr.mxu0 0.0
      %708 = vmatpush1.msra.mxu0 0.0
      %709 = vmatprep.subr.mxu0 0.0
      %710 = vmatpush1.msra.mxu0 0.0
      %711 = vmatprep.subr.mxu0 0.0
      %712 = vmatpush1.msra.mxu0 0.0
      %713 = vmatprep.subr.mxu0 0.0
      %714 = vmatpush1.msra.mxu0 0.0
      %715 = vmatprep.subr.mxu0 0.0
      %716 = vmatpush1.msra.mxu0 0.0
      %717 = vmatprep.subr.mxu0 0.0
      %718 = vmatpush1.msra.mxu0 0.0
      %719 = vmatprep.subr.mxu0 0.0
      %720 = vmatpush1.msra.mxu0 0.0
      %721 = vmatprep.subr.mxu0 0.0
      %722 = vmatpush1.msra.mxu0 0.0
      %723 = vmatprep.subr.mxu0 0.0
      %724 = vmatpush1.msra.mxu0 0.0
      %725 = vmatprep.mubr.f32.mxu0 0.0
      %726 = vmatmul.mubr.f32.gmra.mrb[0].mxu0 %v659
      %v727 = vpop.f32.mrb[0].mxu0
      %v728 = vadd.f32 0.0, %v727
      %v729 = vpop.f32.mrb[0].mxu0
      %730 = vdwg.mxu0
      %v731 = vlaneseq
      %v732 = vshrl.u32 %v731, 7
      %v733 = vsub.s32 0, %v732
      %v734 = vrot.slane %v728, %v733
      %v735 = vmul.f32 %v530, %v734
      %v736 = vmul.f32 %v531, %v734
      %v737 = vlaneseq
      %v738 = vshrl.u32 %v737, 7
      %v739 = vsub.s32 1, %v738
      %v740 = vrot.slane %v728, %v739
      %v741 = vadd.f32 %v735, %v740
      %v742 = vadd.f32 %v736, %v740
      %vm743 = vcmp.ge.f32.partialorder %v741, 0.0
      %vm744 = vcmp.ge.f32.partialorder %v742, 0.0
      %v745 = vmul.f32 %v741, 0.01
      %v746 = vmul.f32 %v742, 0.01
      %v747 = vsel %vm743, %v741, %v745
      %v748 = vsel %vm744, %v742, %v746
      %749 = vst [vmem:[#allocation2 + $0x1] sm:$0xff] %v747
      %750 = vst [vmem:[#allocation2 + $0x9] sm:$0xff] %v748
      %v751 = vld [vmem:[#allocation2] sm:$0xff]
      %v752 = vld [vmem:[#allocation2 + $0x8] sm:$0xff]
      %v753 = vld [vmem:[%s2] sm:$0xff]
      %v754 = vld [vmem:[%s2 + $0x8] sm:$0xff]
      %v755 = vld [vmem:[%s2 + $0x10] sm:$0xff]
      %v756 = vld [vmem:[%s2 + $0x18] sm:$0xff]
      %v757 = vld [vmem:[%s2 + $0x20] sm:$0xff]
      %v758 = vld [vmem:[%s2 + $0x28] sm:$0xff]
      %v759 = vld [vmem:[%s2 + $0x30] sm:$0xff]
      %v760 = vld [vmem:[%s2 + $0x38] sm:$0xff]
      %v761 = vld [vmem:[%s2 + $0x40] sm:$0xff]
      %v762 = vld [vmem:[%s2 + $0x48] sm:$0xff]
      %v763 = vld [vmem:[%s2 + $0x50] sm:$0xff]
      %v764 = vld [vmem:[%s2 + $0x58] sm:$0xff]
      %v765 = vld [vmem:[%s2 + $0x60] sm:$0xff]
      %v766 = vld [vmem:[%s2 + $0x68] sm:$0xff]
      %v767 = vld [vmem:[%s2 + $0x70] sm:$0xff]
      %v768 = vld [vmem:[%s2 + $0x78] sm:$0xff]
      %v769 = vld [vmem:[#allocation2 + $0x1] sm:$0xff]
      %v770 = vld [vmem:[#allocation2 + $0x9] sm:$0xff]
      %s771 = scalar_lea.vmem %s2, 128
      %v772 = vld [vmem:[%s771] sm:$0xff]
      %v773 = vld [vmem:[%s771 + $0x8] sm:$0xff]
      %v774 = vld [vmem:[%s771 + $0x10] sm:$0xff]
      %v775 = vld [vmem:[%s771 + $0x18] sm:$0xff]
      %v776 = vld [vmem:[%s771 + $0x20] sm:$0xff]
      %v777 = vld [vmem:[%s771 + $0x28] sm:$0xff]
      %v778 = vld [vmem:[%s771 + $0x30] sm:$0xff]
      %v779 = vld [vmem:[%s771 + $0x38] sm:$0xff]
      %v780 = vld [vmem:[%s771 + $0x40] sm:$0xff]
      %v781 = vld [vmem:[%s771 + $0x48] sm:$0xff]
      %v782 = vld [vmem:[%s771 + $0x50] sm:$0xff]
      %v783 = vld [vmem:[%s771 + $0x58] sm:$0xff]
      %v784 = vld [vmem:[%s771 + $0x60] sm:$0xff]
      %v785 = vld [vmem:[%s771 + $0x68] sm:$0xff]
      %v786 = vld [vmem:[%s771 + $0x70] sm:$0xff]
      %v787 = vld [vmem:[%s771 + $0x78] sm:$0xff]
      %788 = vmatprep.subr.mxu0 0.0
      %789 = vmatpush1.msra.mxu0 %v772
      %790 = vmatprep.subr.mxu0 0.0
      %791 = vmatpush1.msra.mxu0 %v773
      %792 = vmatprep.subr.mxu0 0.0
      %793 = vmatpush1.msra.mxu0 %v774
      %794 = vmatprep.subr.mxu0 0.0
      %795 = vmatpush1.msra.mxu0 %v775
      %796 = vmatprep.subr.mxu0 0.0
      %797 = vmatpush1.msra.mxu0 %v776
      %798 = vmatprep.subr.mxu0 0.0
      %799 = vmatpush1.msra.mxu0 %v777
      %800 = vmatprep.subr.mxu0 0.0
      %801 = vmatpush1.msra.mxu0 %v778
      %802 = vmatprep.subr.mxu0 0.0
      %803 = vmatpush1.msra.mxu0 %v779
      %804 = vmatprep.subr.mxu0 0.0
      %805 = vmatpush1.msra.mxu0 %v780
      %806 = vmatprep.subr.mxu0 0.0
      %807 = vmatpush1.msra.mxu0 %v781
      %808 = vmatprep.subr.mxu0 0.0
      %809 = vmatpush1.msra.mxu0 %v782
      %810 = vmatprep.subr.mxu0 0.0
      %811 = vmatpush1.msra.mxu0 %v783
      %812 = vmatprep.subr.mxu0 0.0
      %813 = vmatpush1.msra.mxu0 %v784
      %814 = vmatprep.subr.mxu0 0.0
      %815 = vmatpush1.msra.mxu0 %v785
      %816 = vmatprep.subr.mxu0 0.0
      %817 = vmatpush1.msra.mxu0 %v786
      %818 = vmatprep.subr.mxu0 0.0
      %819 = vmatpush1.msra.mxu0 %v787
      %820 = vmatprep.subr.mxu0 0.0
      %821 = vmatpush1.msra.mxu0 0.0
      %822 = vmatprep.subr.mxu0 0.0
      %823 = vmatpush1.msra.mxu0 0.0
      %824 = vmatprep.subr.mxu0 0.0
      %825 = vmatpush1.msra.mxu0 0.0
      %826 = vmatprep.subr.mxu0 0.0
      %827 = vmatpush1.msra.mxu0 0.0
      %828 = vmatprep.subr.mxu0 0.0
      %829 = vmatpush1.msra.mxu0 0.0
      %830 = vmatprep.subr.mxu0 0.0
      %831 = vmatpush1.msra.mxu0 0.0
      %832 = vmatprep.subr.mxu0 0.0
      %833 = vmatpush1.msra.mxu0 0.0
      %834 = vmatprep.subr.mxu0 0.0
      %835 = vmatpush1.msra.mxu0 0.0
      %836 = vmatprep.subr.mxu0 0.0
      %837 = vmatpush1.msra.mxu0 0.0
      %838 = vmatprep.subr.mxu0 0.0
      %839 = vmatpush1.msra.mxu0 0.0
      %840 = vmatprep.subr.mxu0 0.0
      %841 = vmatpush1.msra.mxu0 0.0
      %842 = vmatprep.subr.mxu0 0.0
      %843 = vmatpush1.msra.mxu0 0.0
      %844 = vmatprep.subr.mxu0 0.0
      %845 = vmatpush1.msra.mxu0 0.0
      %846 = vmatprep.subr.mxu0 0.0
      %847 = vmatpush1.msra.mxu0 0.0
      %848 = vmatprep.subr.mxu0 0.0
      %849 = vmatpush1.msra.mxu0 0.0
      %850 = vmatprep.subr.mxu0 0.0
      %851 = vmatpush1.msra.mxu0 0.0
      %852 = vmatprep.mubr.f32.mxu0 0.0
      %853 = vmatmul.mubr.f32.gmra.mrb[0].mxu0 %v769
      %v854 = vpop.f32.mrb[0].mxu0
      %v855 = vadd.f32 0.0, %v854
      %v856 = vpop.f32.mrb[0].mxu0
      %857 = vmatprep.mubr.f32.mxu0 0.0
      %858 = vmatmul.mubr.f32.gmra.mrb[0].mxu0 %v770
      %v859 = vpop.f32.mrb[0].mxu0
      %v860 = vadd.f32 0.0, %v859
      %v861 = vpop.f32.mrb[0].mxu0
      %862 = vdwg.mxu0
      %863 = vmatprep.subr.mxu0 0.0
      %864 = vmatpush1.msra.mxu0 %v753
      %865 = vmatprep.subr.mxu0 0.0
      %866 = vmatpush1.msra.mxu0 %v754
      %867 = vmatprep.subr.mxu0 0.0
      %868 = vmatpush1.msra.mxu0 %v755
      %869 = vmatprep.subr.mxu0 0.0
      %870 = vmatpush1.msra.mxu0 %v756
      %871 = vmatprep.subr.mxu0 0.0
      %872 = vmatpush1.msra.mxu0 %v757
      %873 = vmatprep.subr.mxu0 0.0
      %874 = vmatpush1.msra.mxu0 %v758
      %875 = vmatprep.subr.mxu0 0.0
      %876 = vmatpush1.msra.mxu0 %v759
      %877 = vmatprep.subr.mxu0 0.0
      %878 = vmatpush1.msra.mxu0 %v760
      %879 = vmatprep.subr.mxu0 0.0
      %880 = vmatpush1.msra.mxu0 %v761
      %881 = vmatprep.subr.mxu0 0.0
      %882 = vmatpush1.msra.mxu0 %v762
      %883 = vmatprep.subr.mxu0 0.0
      %884 = vmatpush1.msra.mxu0 %v763
      %885 = vmatprep.subr.mxu0 0.0
      %886 = vmatpush1.msra.mxu0 %v764
      %887 = vmatprep.subr.mxu0 0.0
      %888 = vmatpush1.msra.mxu0 %v765
      %889 = vmatprep.subr.mxu0 0.0
      %890 = vmatpush1.msra.mxu0 %v766
      %891 = vmatprep.subr.mxu0 0.0
      %892 = vmatpush1.msra.mxu0 %v767
      %893 = vmatprep.subr.mxu0 0.0
      %894 = vmatpush1.msra.mxu0 %v768
      %895 = vmatprep.subr.mxu0 0.0
      %896 = vmatpush1.msra.mxu0 0.0
      %897 = vmatprep.subr.mxu0 0.0
      %898 = vmatpush1.msra.mxu0 0.0
      %899 = vmatprep.subr.mxu0 0.0
      %900 = vmatpush1.msra.mxu0 0.0
      %901 = vmatprep.subr.mxu0 0.0
      %902 = vmatpush1.msra.mxu0 0.0
      %903 = vmatprep.subr.mxu0 0.0
      %904 = vmatpush1.msra.mxu0 0.0
      %905 = vmatprep.subr.mxu0 0.0
      %906 = vmatpush1.msra.mxu0 0.0
      %907 = vmatprep.subr.mxu0 0.0
      %908 = vmatpush1.msra.mxu0 0.0
      %909 = vmatprep.subr.mxu0 0.0
      %910 = vmatpush1.msra.mxu0 0.0
      %911 = vmatprep.subr.mxu0 0.0
      %912 = vmatpush1.msra.mxu0 0.0
      %913 = vmatprep.subr.mxu0 0.0
      %914 = vmatpush1.msra.mxu0 0.0
      %915 = vmatprep.subr.mxu0 0.0
      %916 = vmatpush1.msra.mxu0 0.0
      %917 = vmatprep.subr.mxu0 0.0
      %918 = vmatpush1.msra.mxu0 0.0
      %919 = vmatprep.subr.mxu0 0.0
      %920 = vmatpush1.msra.mxu0 0.0
      %921 = vmatprep.subr.mxu0 0.0
      %922 = vmatpush1.msra.mxu0 0.0
      %923 = vmatprep.subr.mxu0 0.0
      %924 = vmatpush1.msra.mxu0 0.0
      %925 = vmatprep.subr.mxu0 0.0
      %926 = vmatpush1.msra.mxu0 0.0
      %927 = vmatprep.mubr.f32.mxu0 0.0
      %928 = vmatmul.mubr.f32.gmra.mrb[0].mxu0 %v751
      %v929 = vpop.f32.mrb[0].mxu0
      %v930 = vadd.f32 %v855, %v929
      %v931 = vpop.f32.mrb[0].mxu0
      %932 = vmatprep.mubr.f32.mxu0 0.0
      %933 = vmatmul.mubr.f32.gmra.mrb[0].mxu0 %v752
      %v934 = vpop.f32.mrb[0].mxu0
      %v935 = vadd.f32 %v860, %v934
      %v936 = vpop.f32.mrb[0].mxu0
      %937 = vdwg.mxu0
      %v938 = vld [vmem:[#allocation2 + $0x2] sm:$0xff]
      %v939 = vld [vmem:[#allocation2 + $0xa] sm:$0xff]
      %s940 = scalar_lea.vmem %s2, 256
      %v941 = vld [vmem:[%s940] sm:$0xff]
      %v942 = vld [vmem:[%s940 + $0x8] sm:$0xff]
      %v943 = vld [vmem:[%s940 + $0x10] sm:$0xff]
      %v944 = vld [vmem:[%s940 + $0x18] sm:$0xff]
      %v945 = vld [vmem:[%s940 + $0x20] sm:$0xff]
      %v946 = vld [vmem:[%s940 + $0x28] sm:$0xff]
      %v947 = vld [vmem:[%s940 + $0x30] sm:$0xff]
      %v948 = vld [vmem:[%s940 + $0x38] sm:$0xff]
      %v949 = vld [vmem:[%s940 + $0x40] sm:$0xff]
      %v950 = vld [vmem:[%s940 + $0x48] sm:$0xff]
      %v951 = vld [vmem:[%s940 + $0x50] sm:$0xff]
      %v952 = vld [vmem:[%s940 + $0x58] sm:$0xff]
      %v953 = vld [vmem:[%s940 + $0x60] sm:$0xff]
      %v954 = vld [vmem:[%s940 + $0x68] sm:$0xff]
      %v955 = vld [vmem:[%s940 + $0x70] sm:$0xff]
      %v956 = vld [vmem:[%s940 + $0x78] sm:$0xff]
      %957 = vmatprep.subr.mxu0 0.0
      %958 = vmatpush1.msra.mxu0 %v941
      %959 = vmatprep.subr.mxu0 0.0
      %960 = vmatpush1.msra.mxu0 %v942
      %961 = vmatprep.subr.mxu0 0.0
      %962 = vmatpush1.msra.mxu0 %v943
      %963 = vmatprep.subr.mxu0 0.0
      %964 = vmatpush1.msra.mxu0 %v944
      %965 = vmatprep.subr.mxu0 0.0
      %966 = vmatpush1.msra.mxu0 %v945
      %967 = vmatprep.subr.mxu0 0.0
      %968 = vmatpush1.msra.mxu0 %v946
      %969 = vmatprep.subr.mxu0 0.0
      %970 = vmatpush1.msra.mxu0 %v947
      %971 = vmatprep.subr.mxu0 0.0
      %972 = vmatpush1.msra.mxu0 %v948
      %973 = vmatprep.subr.mxu0 0.0
      %974 = vmatpush1.msra.mxu0 %v949
      %975 = vmatprep.subr.mxu0 0.0
      %976 = vmatpush1.msra.mxu0 %v950
      %977 = vmatprep.subr.mxu0 0.0
      %978 = vmatpush1.msra.mxu0 %v951
      %979 = vmatprep.subr.mxu0 0.0
      %980 = vmatpush1.msra.mxu0 %v952
      %981 = vmatprep.subr.mxu0 0.0
      %982 = vmatpush1.msra.mxu0 %v953
      %983 = vmatprep.subr.mxu0 0.0
      %984 = vmatpush1.msra.mxu0 %v954
      %985 = vmatprep.subr.mxu0 0.0
      %986 = vmatpush1.msra.mxu0 %v955
      %987 = vmatprep.subr.mxu0 0.0
      %988 = vmatpush1.msra.mxu0 %v956
      %989 = vmatprep.subr.mxu0 0.0
      %990 = vmatpush1.msra.mxu0 0.0
      %991 = vmatprep.subr.mxu0 0.0
      %992 = vmatpush1.msra.mxu0 0.0
      %993 = vmatprep.subr.mxu0 0.0
      %994 = vmatpush1.msra.mxu0 0.0
      %995 = vmatprep.subr.mxu0 0.0
      %996 = vmatpush1.msra.mxu0 0.0
      %997 = vmatprep.subr.mxu0 0.0
      %998 = vmatpush1.msra.mxu0 0.0
      %999 = vmatprep.subr.mxu0 0.0
      %1000 = vmatpush1.msra.mxu0 0.0
      %1001 = vmatprep.subr.mxu0 0.0
      %1002 = vmatpush1.msra.mxu0 0.0
      %1003 = vmatprep.subr.mxu0 0.0
      %1004 = vmatpush1.msra.mxu0 0.0
      %1005 = vmatprep.subr.mxu0 0.0
      %1006 = vmatpush1.msra.mxu0 0.0
      %1007 = vmatprep.subr.mxu0 0.0
      %1008 = vmatpush1.msra.mxu0 0.0
      %1009 = vmatprep.subr.mxu0 0.0
      %1010 = vmatpush1.msra.mxu0 0.0
      %1011 = vmatprep.subr.mxu0 0.0
      %1012 = vmatpush1.msra.mxu0 0.0
      %1013 = vmatprep.subr.mxu0 0.0
      %1014 = vmatpush1.msra.mxu0 0.0
      %1015 = vmatprep.subr.mxu0 0.0
      %1016 = vmatpush1.msra.mxu0 0.0
      %1017 = vmatprep.subr.mxu0 0.0
      %1018 = vmatpush1.msra.mxu0 0.0
      %1019 = vmatprep.subr.mxu0 0.0
      %1020 = vmatpush1.msra.mxu0 0.0
      %1021 = vmatprep.mubr.f32.mxu0 0.0
      %1022 = vmatmul.mubr.f32.gmra.mrb[0].mxu0 %v938
      %v1023 = vpop.f32.mrb[0].mxu0
      %v1024 = vadd.f32 0.0, %v1023
      %v1025 = vpop.f32.mrb[0].mxu0
      %1026 = vmatprep.mubr.f32.mxu0 0.0
      %1027 = vmatmul.mubr.f32.gmra.mrb[0].mxu0 %v939
      %v1028 = vpop.f32.mrb[0].mxu0
      %v1029 = vadd.f32 0.0, %v1028
      %v1030 = vpop.f32.mrb[0].mxu0
      %1031 = vdwg.mxu0
      %v1032 = vadd.f32 %v930, %v1024
      %v1033 = vadd.f32 %v935, %v1029
      %v1034 = vld [vmem:[%s5 + $0x2] sm:$0x1]
      %v1035 = vld [vmem:[%s5 + $0x3] sm:$0x1]
      %v1036 = vadd.f32 %v1032, %v1033
      %v1037 = vrot.slane %v1036, 4
      %v1038 = vadd.f32 %v1036, %v1037
      %v1039 = vrot.slane %v1038, 2
      %v1040 = vadd.f32 %v1038, %v1039
      %v1041 = vrot.slane %v1040, 1
      %v1042 = vadd.f32 %v1040, %v1041
      %v1043 = vmul.f32 %v1032, %v1032
      %v1044 = vmul.f32 %v1033, %v1033
      %v1045 = vadd.f32 %v1043, %v1044
      %v1046 = vrot.slane %v1045, 4
      %v1047 = vadd.f32 %v1045, %v1046
      %v1048 = vrot.slane %v1047, 2
      %v1049 = vadd.f32 %v1047, %v1048
      %v1050 = vrot.slane %v1049, 1
      %v1051 = vadd.f32 %v1049, %v1050
      %v1052 = vsel %vm550, %v1042, %v1051
      %v1053 = vld [vmem:[%s3] sm:$0xff]
      %v1054 = vld [vmem:[%s3 + $0x8] sm:$0xff]
      %v1055 = vld [vmem:[%s3 + $0x10] sm:$0xff]
      %v1056 = vld [vmem:[%s3 + $0x18] sm:$0xff]
      %v1057 = vld [vmem:[%s3 + $0x20] sm:$0xff]
      %v1058 = vld [vmem:[%s3 + $0x28] sm:$0xff]
      %v1059 = vld [vmem:[%s3 + $0x30] sm:$0xff]
      %v1060 = vld [vmem:[%s3 + $0x38] sm:$0xff]
      %v1061 = vld [vmem:[%s3 + $0x40] sm:$0xff]
      %v1062 = vld [vmem:[%s3 + $0x48] sm:$0xff]
      %v1063 = vld [vmem:[%s3 + $0x50] sm:$0xff]
      %v1064 = vld [vmem:[%s3 + $0x58] sm:$0xff]
      %v1065 = vld [vmem:[%s3 + $0x60] sm:$0xff]
      %v1066 = vld [vmem:[%s3 + $0x68] sm:$0xff]
      %v1067 = vld [vmem:[%s3 + $0x70] sm:$0xff]
      %v1068 = vld [vmem:[%s3 + $0x78] sm:$0xff]
      %1069 = vmatprep.subr.mxu0 0.0
      %1070 = vmatpush1.msra.mxu0 %v1053
      %1071 = vmatprep.subr.mxu0 0.0
      %1072 = vmatpush1.msra.mxu0 %v1054
      %1073 = vmatprep.subr.mxu0 0.0
      %1074 = vmatpush1.msra.mxu0 %v1055
      %1075 = vmatprep.subr.mxu0 0.0
      %1076 = vmatpush1.msra.mxu0 %v1056
      %1077 = vmatprep.subr.mxu0 0.0
      %1078 = vmatpush1.msra.mxu0 %v1057
      %1079 = vmatprep.subr.mxu0 0.0
      %1080 = vmatpush1.msra.mxu0 %v1058
      %1081 = vmatprep.subr.mxu0 0.0
      %1082 = vmatpush1.msra.mxu0 %v1059
      %1083 = vmatprep.subr.mxu0 0.0
      %1084 = vmatpush1.msra.mxu0 %v1060
      %1085 = vmatprep.subr.mxu0 0.0
      %1086 = vmatpush1.msra.mxu0 %v1061
      %1087 = vmatprep.subr.mxu0 0.0
      %1088 = vmatpush1.msra.mxu0 %v1062
      %1089 = vmatprep.subr.mxu0 0.0
      %1090 = vmatpush1.msra.mxu0 %v1063
      %1091 = vmatprep.subr.mxu0 0.0
      %1092 = vmatpush1.msra.mxu0 %v1064
      %1093 = vmatprep.subr.mxu0 0.0
      %1094 = vmatpush1.msra.mxu0 %v1065
      %1095 = vmatprep.subr.mxu0 0.0
      %1096 = vmatpush1.msra.mxu0 %v1066
      %1097 = vmatprep.subr.mxu0 0.0
      %1098 = vmatpush1.msra.mxu0 %v1067
      %1099 = vmatprep.subr.mxu0 0.0
      %1100 = vmatpush1.msra.mxu0 %v1068
      %1101 = vmatprep.subr.mxu0 0.0
      %1102 = vmatpush1.msra.mxu0 0.0
      %1103 = vmatprep.subr.mxu0 0.0
      %1104 = vmatpush1.msra.mxu0 0.0
      %1105 = vmatprep.subr.mxu0 0.0
      %1106 = vmatpush1.msra.mxu0 0.0
      %1107 = vmatprep.subr.mxu0 0.0
      %1108 = vmatpush1.msra.mxu0 0.0
      %1109 = vmatprep.subr.mxu0 0.0
      %1110 = vmatpush1.msra.mxu0 0.0
      %1111 = vmatprep.subr.mxu0 0.0
      %1112 = vmatpush1.msra.mxu0 0.0
      %1113 = vmatprep.subr.mxu0 0.0
      %1114 = vmatpush1.msra.mxu0 0.0
      %1115 = vmatprep.subr.mxu0 0.0
      %1116 = vmatpush1.msra.mxu0 0.0
      %1117 = vmatprep.subr.mxu0 0.0
      %1118 = vmatpush1.msra.mxu0 0.0
      %1119 = vmatprep.subr.mxu0 0.0
      %1120 = vmatpush1.msra.mxu0 0.0
      %1121 = vmatprep.subr.mxu0 0.0
      %1122 = vmatpush1.msra.mxu0 0.0
      %1123 = vmatprep.subr.mxu0 0.0
      %1124 = vmatpush1.msra.mxu0 0.0
      %1125 = vmatprep.subr.mxu0 0.0
      %1126 = vmatpush1.msra.mxu0 0.0
      %1127 = vmatprep.subr.mxu0 0.0
      %1128 = vmatpush1.msra.mxu0 0.0
      %1129 = vmatprep.subr.mxu0 0.0
      %1130 = vmatpush1.msra.mxu0 0.0
      %1131 = vmatprep.subr.mxu0 0.0
      %1132 = vmatpush1.msra.mxu0 0.0
      %1133 = vmatprep.mubr.f32.mxu0 0.0
      %1134 = vmatmul.mubr.f32.gmra.mrb[0].mxu0 %v1052
      %v1135 = vpop.f32.mrb[0].mxu0
      %v1136 = vadd.f32 0.0, %v1135
      %v1137 = vpop.f32.mrb[0].mxu0
      %1138 = vdwg.mxu0
      %v1139 = vmul.f32 %v1136, 0.00390625
      %v1140 = vmul.f32 %v1139, %v1139
      %v1142 = vrot.slane %v1140, 7
      %v1144 = vsub.f32 %v1139, %v1142
      %v1145 = vadd.f32 %v1144, 1e-05
      %v1146 = vrsqrt.pop %v1145
      %v1148 = vrot.slane %v1146, 1
      %v1150 = vmul.f32 %v1034, %v1148
      %v1151 = vmul.f32 %v1139, %v1150
      %v1152 = vsub.f32 %v1035, %v1151
      %v1154 = vrot.slane %v1152, 7
      %v1156 = vsel %vm550, %v1150, %v1154
      %v1157 = vld [vmem:[%s4] sm:$0xff]
      %v1159 = vsel %vm657, %v1156, 0
      %1161 = vmatprep.subr.mxu0 0.0
      %1162 = vmatpush1.msra.mxu0 %v1157
      %1163 = vmatprep.subr.mxu0 0.0
      %1164 = vmatpush1.msra.mxu0 0.0
      %1165 = vmatprep.subr.mxu0 0.0
      %1166 = vmatpush1.msra.mxu0 0.0
      %1167 = vmatprep.subr.mxu0 0.0
      %1168 = vmatpush1.msra.mxu0 0.0
      %1169 = vmatprep.subr.mxu0 0.0
      %1170 = vmatpush1.msra.mxu0 0.0
      %1171 = vmatprep.subr.mxu0 0.0
      %1172 = vmatpush1.msra.mxu0 0.0
      %1173 = vmatprep.subr.mxu0 0.0
      %1174 = vmatpush1.msra.mxu0 0.0
      %1175 = vmatprep.subr.mxu0 0.0
      %1176 = vmatpush1.msra.mxu0 0.0
      %1177 = vmatprep.subr.mxu0 0.0
      %1178 = vmatpush1.msra.mxu0 0.0
      %1179 = vmatprep.subr.mxu0 0.0
      %1180 = vmatpush1.msra.mxu0 0.0
      %1181 = vmatprep.subr.mxu0 0.0
      %1182 = vmatpush1.msra.mxu0 0.0
      %1183 = vmatprep.subr.mxu0 0.0
      %1184 = vmatpush1.msra.mxu0 0.0
      %1185 = vmatprep.subr.mxu0 0.0
      %1186 = vmatpush1.msra.mxu0 0.0
      %1187 = vmatprep.subr.mxu0 0.0
      %1188 = vmatpush1.msra.mxu0 0.0
      %1189 = vmatprep.subr.mxu0 0.0
      %1190 = vmatpush1.msra.mxu0 0.0
      %1191 = vmatprep.subr.mxu0 0.0
      %1192 = vmatpush1.msra.mxu0 0.0
      %1193 = vmatprep.subr.mxu0 0.0
      %1194 = vmatpush1.msra.mxu0 0.0
      %1195 = vmatprep.subr.mxu0 0.0
      %1196 = vmatpush1.msra.mxu0 0.0
      %1197 = vmatprep.subr.mxu0 0.0
      %1198 = vmatpush1.msra.mxu0 0.0
      %1199 = vmatprep.subr.mxu0 0.0
      %1200 = vmatpush1.msra.mxu0 0.0
      %1201 = vmatprep.subr.mxu0 0.0
      %1202 = vmatpush1.msra.mxu0 0.0
      %1203 = vmatprep.subr.mxu0 0.0
      %1204 = vmatpush1.msra.mxu0 0.0
      %1205 = vmatprep.subr.mxu0 0.0
      %1206 = vmatpush1.msra.mxu0 0.0
      %1207 = vmatprep.subr.mxu0 0.0
      %1208 = vmatpush1.msra.mxu0 0.0
      %1209 = vmatprep.subr.mxu0 0.0
      %1210 = vmatpush1.msra.mxu0 0.0
      %1211 = vmatprep.subr.mxu0 0.0
      %1212 = vmatpush1.msra.mxu0 0.0
      %1213 = vmatprep.subr.mxu0 0.0
      %1214 = vmatpush1.msra.mxu0 0.0
      %1215 = vmatprep.subr.mxu0 0.0
      %1216 = vmatpush1.msra.mxu0 0.0
      %1217 = vmatprep.subr.mxu0 0.0
      %1218 = vmatpush1.msra.mxu0 0.0
      %1219 = vmatprep.subr.mxu0 0.0
      %1220 = vmatpush1.msra.mxu0 0.0
      %1221 = vmatprep.subr.mxu0 0.0
      %1222 = vmatpush1.msra.mxu0 0.0
      %1223 = vmatprep.subr.mxu0 0.0
      %1224 = vmatpush1.msra.mxu0 0.0
      %1225 = vmatprep.mubr.f32.mxu0 0.0
      %1226 = vmatmul.mubr.f32.gmra.mrb[0].mxu0 %v1159
      %v1227 = vpop.f32.mrb[0].mxu0
      %v1228 = vadd.f32 0.0, %v1227
      %v1229 = vpop.f32.mrb[0].mxu0
      %1230 = vdwg.mxu0
      %v1231 = vlaneseq
      %v1232 = vshrl.u32 %v1231, 7
      %v1233 = vsub.s32 0, %v1232
      %v1234 = vrot.slane %v1228, %v1233
      %v1235 = vmul.f32 %v1032, %v1234
      %v1236 = vmul.f32 %v1033, %v1234
      %v1237 = vlaneseq
      %v1238 = vshrl.u32 %v1237, 7
      %v1239 = vsub.s32 1, %v1238
      %v1240 = vrot.slane %v1228, %v1239
      %v1241 = vadd.f32 %v1235, %v1240
      %v1242 = vadd.f32 %v1236, %v1240
      %vm1243 = vcmp.ge.f32.partialorder %v1241, 0.0
      %vm1244 = vcmp.ge.f32.partialorder %v1242, 0.0
      %v1245 = vmul.f32 %v1241, 0.01
      %v1246 = vmul.f32 %v1242, 0.01
      %v1247 = vsel %vm1243, %v1241, %v1245
      %v1248 = vsel %vm1244, %v1242, %v1246
      %1249 = vst [vmem:[%s251] sm:$0xff] %v1247
      %1250 = vst [vmem:[%s251 + $0x8] sm:$0xff] %v1248
      %p1251 = scmp.lt.s32.totalorder %s17, 1
      %s1252 = scalar_select %p1251, %s17, 1
      %s1253 = smul.addr %s1252, 2
      %s1254 = smul.addr %s1253, 8
      %s1255 = scalar_lea.vmem %s6, %s1254
      // Predicated region
      $region45: #{inconv_forward.1} parent=43 // pred_check
        %p1256 = pneg %p166
      $region46: #{inconv_forward.1} parent=43 // pred_check_branch
        %1258 = sbr.rel (%p1256) target = $region48
      $region47: #{inconv_forward.1} parent=43 // pred_region
        _
      $region48: #{inconv_forward.1} parent=43 // pred_fallthru
        _
    $region44: #{inconv_forward.1} parent=5 // pred_fallthru
      _
    %p1259 = scmp.le.s32.totalorder 2, %s12
    // Predicated region
    $region49: #{inconv_forward.1} parent=5 // pred_check
      %p1260 = pneg %p1259
    $region50: #{inconv_forward.1} parent=5 // pred_check_branch
      %1262 = sbr.rel (%p1260) target = $region52
    $region51: #{inconv_forward.1} parent=5 // pred_region
      %s1263 = ssub.s32 %s12, 2
      // Predicated region
      $region53: #{inconv_forward.1} parent=51 // pred_check
        %p1264 = pneg %p172
      $region54: #{inconv_forward.1} parent=51 // pred_check_branch
        %1266 = sbr.rel (%p1264) target = $region56
      $region55: #{inconv_forward.1} parent=51 // pred_region
        %p1267 = scmp.lt.s32.totalorder %s18, 1
        %s1268 = scalar_select %p1267, %s18, 1
        %s1269 = smul.addr %s1268, 2
        %s1270 = smul.addr %s1269, 8
        %s1271 = scalar_lea.vmem %s6, %s1270
      $region56: #{inconv_forward.1} parent=51 // pred_fallthru
        _
    $region52: #{inconv_forward.1} parent=5 // pred_fallthru
      _
  $region6: #{inconv_forward.1} parent=0 // loop_footer
    %s16 = sadd.s32 1, %s12
  $region7: #{inconv_forward.1} parent=0 // loop_footer_branch
    %11 = sbr.rel target = $region3
  $region8: #{inconv_forward.1} parent=0 // loop_exit
    _

</llo_original>
